<compile_context>
chip_gen: v7x
topology: tpu7x:2x2x1
jax: 0.10.0
libtpu: 0.0.40
codegen_flags: <defaults>
</compile_context>

<pallas_src>
import math

import jax
import jax.numpy as jnp
from jax.experimental import pallas as pl
from jax.experimental.pallas import tpu as pltpu

# ----------------------------- config (small) --------------------------------
B = 2            # batch
S = 8            # sequence length
M = B * S        # flattened tokens
H = 32           # hidden size
NH = 4           # attention heads
HD = H // NH     # head dim
FF = 64          # FFN intermediate size
L = 2            # encoder layers
VOCAB = 100
MAX_POS = 16
NUM_LABELS = 3
LN_EPS = 1e-12

LANES = 128              # lane-dense padding width
QKV_W = 128              # fused QKV width: q[0:H) k[H:2H) v[2H:3H), zero pad to 128
C_WO = QKV_W             # weight-slab column offsets
C_WI = C_WO + H
C_WO2T = C_WI + FF
WCOLS = C_WO2T + FF      # 288


# ----------------------------- in-kernel helpers -----------------------------
def _layer_norm(x, gamma, beta):
    mu = jnp.mean(x, axis=-1, keepdims=True)
    var = jnp.mean((x - mu) ** 2, axis=-1, keepdims=True)
    return (x - mu) * jax.lax.rsqrt(var + LN_EPS) * gamma + beta


def _gelu_tanh(x):
    # TODO(synk): HF BERT default "gelu" is exact erf-GELU; tanh approximation is
    # used since erf lowering inside Mosaic is not guaranteed.
    c = math.sqrt(2.0 / math.pi)
    return 0.5 * x * (1.0 + jnp.tanh(c * (x + 0.044715 * x * x * x)))


# ------------------- fused encoder + pooling/classifier kernel ---------------
def bert_encoder_head_kernel(h0_ref, bias_ref, pool_ref, w_ref, b_ref,
                             wcls_ref, head_ref, logits_ref, loss_ref, h_scr):
    layer = pl.program_id(0)

    # Layer 0: seed the resident VMEM carry with the embedding output.
    @pl.when(layer == 0)
    def _():
        h_scr[...] = h0_ref[...]

    h = h_scr[...]                                  # (M, H) f32
    w = w_ref[0]                                    # (H, WCOLS) bf16
    b = b_ref[0]                                    # (8, LANES) f32

    # ---- fused QKV projection: one (M,H) x (H,128) MXU op --------------------
    qkv = jnp.dot(h.astype(jnp.bfloat16), w[:, :QKV_W],
                  preferred_element_type=jnp.float32) + b[0:1, :]   # (M, 128) f32
    qkv_b = qkv.astype(jnp.bfloat16)

    def split_heads(base):                          # -> (NH, M, HD) bf16
        return jnp.stack(
            [qkv_b[:, base + hh * HD: base + (hh + 1) * HD] for hh in range(NH)],
            axis=0)

    qh = split_heads(0)          # 1/sqrt(HD) already folded into Wq / bq
    kh = split_heads(H)
    vh = split_heads(2 * H)

    # ---- head-batched attention, single softmax over all heads ---------------
    sc = jnp.einsum('hqd,hkd->hqk', qh, kh,
                    preferred_element_type=jnp.float32)             # (NH, M, M)
    sc = sc + bias_ref[...][None, :, :]     # block-diag batch + key-padding bias
    m = jnp.max(sc, axis=-1, keepdims=True)
    e = jnp.exp(sc - m)
    p = e * pl.reciprocal(jnp.sum(e, axis=-1, keepdims=True), approx=True)
    ctx = jnp.einsum('hqk,hkd->hqd', p.astype(jnp.bfloat16), vh,
                     preferred_element_type=jnp.float32)            # (NH, M, HD)
    ctx_cat = jnp.concatenate([ctx[hh] for hh in range(NH)], axis=-1)   # (M, H)

    attn = jnp.dot(ctx_cat.astype(jnp.bfloat16), w[:, C_WO:C_WO + H],
                   preferred_element_type=jnp.float32) + b[1:2, :H]
    h1 = _layer_norm(h + attn, b[4:5, :H], b[5:6, :H])

    # ---- FFN ------------------------------------------------------------------
    inter = jnp.dot(h1.astype(jnp.bfloat16), w[:, C_WI:C_WI + FF],
                    preferred_element_type=jnp.float32) + b[2:3, :FF]
    inter = _gelu_tanh(inter)
    wo2t = w[:, C_WO2T:C_WO2T + FF]                 # (H, FF) bf16 = Wo2^T
    ffn = jnp.einsum('mf,hf->mh', inter.astype(jnp.bfloat16), wo2t,
                     preferred_element_type=jnp.float32) + b[3:4, :H]
    h2 = _layer_norm(h1 + ffn, b[6:7, :H], b[7:8, :H])
    h_scr[...] = h2

    # ---- pooling + classifier + BCEWithLogits, fused into the last layer -----
    @pl.when(layer == pl.num_programs(0) - 1)
    def _():
        head = head_ref[...]                        # (1+B, LANES) f32
        pooled = jnp.dot(pool_ref[...], h2,
                         preferred_element_type=jnp.float32)        # (B, H)
        logits = jnp.dot(pooled, wcls_ref[...],
                         preferred_element_type=jnp.float32) + head[0:1, :]
        logits_ref[...] = logits                                    # (B, 128) lane-dense
        lg = logits[:, :NUM_LABELS]
        y = head[1:1 + B, :NUM_LABELS]
        loss_el = (jnp.maximum(lg, 0.0) - lg * y +
                   jnp.log(1.0 + jnp.exp(-jnp.abs(lg))))
        loss_ref[...] = jnp.broadcast_to(jnp.mean(loss_el), (1, 1))


def _bert_pallas(h0_flat, attn_bias, pool_mat, w_slab, b_slab, w_cls_pad, head_slab):
    in_specs = [
        pl.BlockSpec((M, H), lambda l: (0, 0)),              # h0 (flattened)
        pl.BlockSpec((M, M), lambda l: (0, 0)),              # attention bias
        pl.BlockSpec((B, M), lambda l: (0, 0)),              # pooling matrix
        pl.BlockSpec((1, H, WCOLS), lambda l: (l, 0, 0)),    # per-layer weight slab
        pl.BlockSpec((1, 8, LANES), lambda l: (l, 0, 0)),    # per-layer bias/LN slab
        pl.BlockSpec((H, LANES), lambda l: (0, 0)),          # classifier weight (padded)
        pl.BlockSpec((1 + B, LANES), lambda l: (0, 0)),      # [b_cls ; labels] slab
    ]
    out_specs = (
        pl.BlockSpec((B, LANES), lambda l: (0, 0)),          # logits (padded to 128)
        pl.BlockSpec((1, 1), lambda l: (0, 0)),              # loss
    )
    return pl.pallas_call(
        bert_encoder_head_kernel,
        out_shape=(jax.ShapeDtypeStruct((B, LANES), jnp.float32),
                   jax.ShapeDtypeStruct((1, 1), jnp.float32)),
        grid=(L,),
        in_specs=in_specs,
        out_specs=out_specs,
        scratch_shapes=[pltpu.VMEM((M, H), jnp.float32)],    # resident layer carry
        compiler_params=pltpu.CompilerParams(
            dimension_semantics=("arbitrary",)),
    )(h0_flat, attn_bias, pool_mat, w_slab, b_slab, w_cls_pad, head_slab)


# ----------------------------- parameters ------------------------------------
def init_params(key):
    keys = iter(jax.random.split(key, 16))

    def nrm(shape):
        return (0.02 * jax.random.normal(next(keys), shape)).astype(jnp.float32)

    p = {}
    p['word_emb'] = nrm((VOCAB, H))
    p['pos_emb'] = nrm((MAX_POS, H))
    p['type_emb'] = nrm((2, H))
    p['emb_ln_g'] = jnp.ones((H,), jnp.float32)
    p['emb_ln_b'] = jnp.zeros((H,), jnp.float32)
    p['wq'] = nrm((L, H, H)); p['bq'] = jnp.zeros((L, 1, H), jnp.float32)
    p['wk'] = nrm((L, H, H)); p['bk'] = jnp.zeros((L, 1, H), jnp.float32)
    p['wv'] = nrm((L, H, H)); p['bv'] = jnp.zeros((L, 1, H), jnp.float32)
    p['wo'] = nrm((L, H, H)); p['bo'] = jnp.zeros((L, 1, H), jnp.float32)
    p['ln1_g'] = jnp.ones((L, 1, H), jnp.float32)
    p['ln1_b'] = jnp.zeros((L, 1, H), jnp.float32)
    p['wi'] = nrm((L, H, FF)); p['bi'] = jnp.zeros((L, 1, FF), jnp.float32)
    p['wo2'] = nrm((L, FF, H)); p['bo2'] = jnp.zeros((L, 1, H), jnp.float32)
    p['ln2_g'] = jnp.ones((L, 1, H), jnp.float32)
    p['ln2_b'] = jnp.zeros((L, 1, H), jnp.float32)
    p['w_cls'] = nrm((H, NUM_LABELS))
    p['b_cls'] = jnp.zeros((1, NUM_LABELS), jnp.float32)
    return p


def pack_params(p):
    """Pack per-layer params into 2 slabs (weights bf16, biases/LN f32)."""
    scale = 1.0 / math.sqrt(HD)
    wq = p['wq'] * scale                     # fold attention scale into Wq / bq
    bq = p['bq'] * scale

    wqkv = jnp.concatenate([wq, p['wk'], p['wv']], axis=-1)          # (L, H, 3H)
    wqkv = jnp.pad(wqkv, ((0, 0), (0, 0), (0, QKV_W - 3 * H)))       # (L, H, 128)
    wo2t = jnp.swapaxes(p['wo2'], 1, 2)                              # (L, H, FF)
    w_slab = jnp.concatenate([wqkv, p['wo'], p['wi'], wo2t],
                             axis=-1).astype(jnp.bfloat16)           # (L, H, 288)

    def lane_row(x):                                                 # (L,1,w)->(L,1,128)
        return jnp.pad(x, ((0, 0), (0, 0), (0, LANES - x.shape[-1])))

    bqkv = jnp.concatenate([bq, p['bk'], p['bv']], axis=-1)          # (L, 1, 3H)
    b_slab = jnp.concatenate(
        [lane_row(bqkv), lane_row(p['bo']), lane_row(p['bi']), lane_row(p['bo2']),
         lane_row(p['ln1_g']), lane_row(p['ln1_b']),
         lane_row(p['ln2_g']), lane_row(p['ln2_b'])],
        axis=1).astype(jnp.float32)                                  # (L, 8, 128)

    return {
        'word_emb': p['word_emb'], 'pos_emb': p['pos_emb'], 'type_emb': p['type_emb'],
        'emb_ln_g': p['emb_ln_g'], 'emb_ln_b': p['emb_ln_b'],
        'w_slab': w_slab, 'b_slab': b_slab,
        'w_cls_pad': jnp.pad(p['w_cls'], ((0, 0), (0, LANES - NUM_LABELS))),
        'b_cls_pad': jnp.pad(p['b_cls'], ((0, 0), (0, LANES - NUM_LABELS))),
    }


# ----------------------------- full forward ----------------------------------
def bert_multilabel_forward(packed, input_ids, attention_mask, token_type_ids, labels):
    mask_f = attention_mask.astype(jnp.float32)                      # (B, S)
    labels_f = labels.astype(jnp.float32)

    # Embeddings (gather + LayerNorm): glue in plain JAX.
    seq = input_ids.shape[1]
    we = packed['word_emb'][input_ids]
    pe = packed['pos_emb'][:seq][None, :, :]
    te = packed['type_emb'][token_type_ids]
    x = we + pe + te
    mu = jnp.mean(x, axis=-1, keepdims=True)
    var = jnp.mean((x - mu) ** 2, axis=-1, keepdims=True)
    h0 = ((x - mu) * jax.lax.rsqrt(var + LN_EPS)
          * packed['emb_ln_g'] + packed['emb_ln_b'])
    h0_flat = h0.reshape(M, H)

    # Attention bias over flattened tokens: same-batch AND key-valid, else -1e9.
    batch_ids = jnp.repeat(jnp.arange(B), S)                         # (M,)
    same_batch = batch_ids[:, None] == batch_ids[None, :]
    key_valid = mask_f.reshape(M) > 0.5
    attn_bias = jnp.where(same_batch & key_valid[None, :],
                          0.0, -1e9).astype(jnp.float32)             # (M, M)

    # Masked-mean pooling expressed as a (B, M) matrix (guards all-pad rows).
    denom = jnp.maximum(jnp.sum(mask_f, axis=1, keepdims=True), 1.0)
    pool_mat = (jnp.eye(B, dtype=jnp.float32)[:, :, None]
                * (mask_f / denom)[:, None, :]).reshape(B, M)

    # Classifier bias + labels, lane-padded into one small slab.
    labels_pad = jnp.pad(labels_f, ((0, 0), (0, LANES - NUM_LABELS)))
    head_slab = jnp.concatenate([packed['b_cls_pad'], labels_pad], axis=0)  # (1+B, 128)

    logits_pad, loss = _bert_pallas(h0_flat, attn_bias, pool_mat,
                                    packed['w_slab'], packed['b_slab'],
                                    packed['w_cls_pad'], head_slab)
    return logits_pad[:, :NUM_LABELS], loss[0, 0]


# ----------------------------- main -------------------------------------------
if __name__ == "__main__":
    root = jax.random.PRNGKey(0)
    k_params, k_ids, k_labels = jax.random.split(root, 3)

    params = init_params(k_params)
    packed = pack_params(params)

    input_ids = jax.random.randint(k_ids, (B, S), 0, VOCAB, dtype=jnp.int32)
    attention_mask = jnp.array([[1] * S,
                                [1] * (S - 2) + [0] * 2], dtype=jnp.int32)
    token_type_ids = jnp.zeros((B, S), dtype=jnp.int32)
    labels = jax.random.bernoulli(k_labels, 0.5, (B, NUM_LABELS)).astype(jnp.float32)

    fwd = jax.jit(bert_multilabel_forward)
    logits, loss = fwd(packed, input_ids, attention_mask, token_type_ids, labels)
    jax.block_until_ready((logits, loss))

    assert logits.shape == (B, NUM_LABELS)
    assert loss.shape == ()
    print("KERNEL_OK")
</pallas_src>

<mosaic_0001>
module attributes {stable_mosaic.version = 11 : i64} {
  func.func @bert_encoder_head_kernel(%arg0: i32, %arg1: memref<16x32xf32, #tpu.memory_space<vmem>>, %arg2: memref<16x16xf32, #tpu.memory_space<vmem>>, %arg3: memref<2x16xf32, #tpu.memory_space<vmem>>, %arg4: memref<1x32x288xbf16, #tpu.memory_space<vmem>>, %arg5: memref<1x8x128xf32, #tpu.memory_space<vmem>>, %arg6: memref<32x128xf32, #tpu.memory_space<vmem>>, %arg7: memref<3x128xf32, #tpu.memory_space<vmem>>, %arg8: memref<2x128xf32, #tpu.memory_space<vmem>>, %arg9: memref<1x1xf32, #tpu.memory_space<vmem>>, %arg10: memref<16x32xf32, #tpu.memory_space<vmem>>) attributes {dimension_semantics = [#tpu.dimension_semantics<arbitrary>], iteration_bounds = array<i64: 2>, scalar_prefetch = 0 : i64, scratch_operands = 1 : i64, tpu.core_type = #tpu.core_type<tc>, window_params = [{pipeline_mode = #tpu.pipeline_mode<synchronous>, transform_indices = @transform_0, window_bounds = array<i64: 16, 32>}, {pipeline_mode = #tpu.pipeline_mode<synchronous>, transform_indices = @transform_1, window_bounds = array<i64: 16, 16>}, {pipeline_mode = #tpu.pipeline_mode<synchronous>, transform_indices = @transform_2, window_bounds = array<i64: 2, 16>}, {transform_indices = @transform_3, window_bounds = array<i64: 1, 32, 288>}, {transform_indices = @transform_4, window_bounds = array<i64: 1, 8, 128>}, {pipeline_mode = #tpu.pipeline_mode<synchronous>, transform_indices = @transform_5, window_bounds = array<i64: 32, 128>}, {pipeline_mode = #tpu.pipeline_mode<synchronous>, transform_indices = @transform_6, window_bounds = array<i64: 3, 128>}, {pipeline_mode = #tpu.pipeline_mode<synchronous>, transform_indices = @transform_7, window_bounds = array<i64: 2, 128>}, {pipeline_mode = #tpu.pipeline_mode<synchronous>, transform_indices = @transform_8, window_bounds = array<i64: 1, 1>}]} {
    %c0_i32 = arith.constant 0 : i32
    %0 = arith.cmpi eq, %arg0, %c0_i32 : i32
    %1 = arith.extui %0 : i1 to i32
    %c0_i32_0 = arith.constant 0 : i32
    %2 = arith.cmpi ne, %1, %c0_i32_0 : i32
    scf.if %2 {
      %c0_34 = arith.constant 0 : index
      %c0_35 = arith.constant 0 : index
      %153 = vector.load %arg1[%c0_34, %c0_35] : memref<16x32xf32, #tpu.memory_space<vmem>>, vector<16x32xf32>
      %c0_36 = arith.constant 0 : index
      %c0_37 = arith.constant 0 : index
      %154 = vector.load %arg10[%c0_36, %c0_37] : memref<16x32xf32, #tpu.memory_space<vmem>>, vector<16x32xf32>
      tpu.vector_store %arg10[%c0_36, %c0_37], %153 {strides = array<i32>} : memref<16x32xf32, #tpu.memory_space<vmem>>, vector<16x32xf32>,
    } else {
    }
    %c0 = arith.constant 0 : index
    %c0_1 = arith.constant 0 : index
    %3 = vector.load %arg10[%c0, %c0_1] : memref<16x32xf32, #tpu.memory_space<vmem>>, vector<16x32xf32>
    %c0_2 = arith.constant 0 : index
    %c0_3 = arith.constant 0 : index
    %c0_4 = arith.constant 0 : index
    %4 = vector.load %arg4[%c0_2, %c0_3, %c0_4] : memref<1x32x288xbf16, #tpu.memory_space<vmem>>, vector<1x32x288xbf16>
    %5 = vector.shape_cast %4 : vector<1x32x288xbf16> to vector<32x288xbf16>
    %c0_5 = arith.constant 0 : index
    %c0_6 = arith.constant 0 : index
    %c0_7 = arith.constant 0 : index
    %6 = vector.load %arg5[%c0_5, %c0_6, %c0_7] : memref<1x8x128xf32, #tpu.memory_space<vmem>>, vector<1x8x128xf32>
    %7 = vector.shape_cast %6 : vector<1x8x128xf32> to vector<8x128xf32>
    %8 = arith.truncf %3 : vector<16x32xf32> to vector<16x32xbf16>
    %9 = vector.extract_strided_slice %5 {offsets = [0, 0], sizes = [32, 128], strides = [1, 1]} : vector<32x288xbf16> to vector<32x128xbf16>
    %cst = arith.constant dense<0.000000e+00> : vector<16x128xf32>
    %10 = tpu.matmul %8, %9, %cst {dimension_numbers = #tpu.dot_dimension_numbers<[1], [0], [0], [1], [0, 0, 1, 1], [], []>} : vector<16x32xbf16>, vector<32x128xbf16>, vector<16x128xf32> -> vector<16x128xf32>
    %11 = vector.extract_strided_slice %7 {offsets = [0, 0], sizes = [1, 128], strides = [1, 1]} : vector<8x128xf32> to vector<1x128xf32>
    %12 = vector.broadcast %11 : vector<1x128xf32> to vector<16x128xf32>
    %13 = arith.addf %10, %12 : vector<16x128xf32>
    %14 = arith.truncf %13 : vector<16x128xf32> to vector<16x128xbf16>
    %15 = vector.extract_strided_slice %14 {offsets = [0, 0], sizes = [16, 8], strides = [1, 1]} : vector<16x128xbf16> to vector<16x8xbf16>
    %16 = vector.extract_strided_slice %14 {offsets = [0, 8], sizes = [16, 8], strides = [1, 1]} : vector<16x128xbf16> to vector<16x8xbf16>
    %17 = vector.extract_strided_slice %14 {offsets = [0, 16], sizes = [16, 8], strides = [1, 1]} : vector<16x128xbf16> to vector<16x8xbf16>
    %18 = vector.extract_strided_slice %14 {offsets = [0, 24], sizes = [16, 8], strides = [1, 1]} : vector<16x128xbf16> to vector<16x8xbf16>
    %19 = vector.shape_cast %15 : vector<16x8xbf16> to vector<1x16x8xbf16>
    %20 = vector.shape_cast %16 : vector<16x8xbf16> to vector<1x16x8xbf16>
    %21 = vector.shape_cast %17 : vector<16x8xbf16> to vector<1x16x8xbf16>
    %22 = vector.shape_cast %18 : vector<16x8xbf16> to vector<1x16x8xbf16>
    %23 = tpu.concatenate %19, %20, %21, %22 in 0 : vector<1x16x8xbf16>, vector<1x16x8xbf16>, vector<1x16x8xbf16>, vector<1x16x8xbf16> -> vector<4x16x8xbf16>
    %24 = vector.extract_strided_slice %14 {offsets = [0, 32], sizes = [16, 8], strides = [1, 1]} : vector<16x128xbf16> to vector<16x8xbf16>
    %25 = vector.extract_strided_slice %14 {offsets = [0, 40], sizes = [16, 8], strides = [1, 1]} : vector<16x128xbf16> to vector<16x8xbf16>
    %26 = vector.extract_strided_slice %14 {offsets = [0, 48], sizes = [16, 8], strides = [1, 1]} : vector<16x128xbf16> to vector<16x8xbf16>
    %27 = vector.extract_strided_slice %14 {offsets = [0, 56], sizes = [16, 8], strides = [1, 1]} : vector<16x128xbf16> to vector<16x8xbf16>
    %28 = vector.shape_cast %24 : vector<16x8xbf16> to vector<1x16x8xbf16>
    %29 = vector.shape_cast %25 : vector<16x8xbf16> to vector<1x16x8xbf16>
    %30 = vector.shape_cast %26 : vector<16x8xbf16> to vector<1x16x8xbf16>
    %31 = vector.shape_cast %27 : vector<16x8xbf16> to vector<1x16x8xbf16>
    %32 = tpu.concatenate %28, %29, %30, %31 in 0 : vector<1x16x8xbf16>, vector<1x16x8xbf16>, vector<1x16x8xbf16>, vector<1x16x8xbf16> -> vector<4x16x8xbf16>
    %33 = vector.extract_strided_slice %14 {offsets = [0, 64], sizes = [16, 8], strides = [1, 1]} : vector<16x128xbf16> to vector<16x8xbf16>
    %34 = vector.extract_strided_slice %14 {offsets = [0, 72], sizes = [16, 8], strides = [1, 1]} : vector<16x128xbf16> to vector<16x8xbf16>
    %35 = vector.extract_strided_slice %14 {offsets = [0, 80], sizes = [16, 8], strides = [1, 1]} : vector<16x128xbf16> to vector<16x8xbf16>
    %36 = vector.extract_strided_slice %14 {offsets = [0, 88], sizes = [16, 8], strides = [1, 1]} : vector<16x128xbf16> to vector<16x8xbf16>
    %37 = vector.shape_cast %33 : vector<16x8xbf16> to vector<1x16x8xbf16>
    %38 = vector.shape_cast %34 : vector<16x8xbf16> to vector<1x16x8xbf16>
    %39 = vector.shape_cast %35 : vector<16x8xbf16> to vector<1x16x8xbf16>
    %40 = vector.shape_cast %36 : vector<16x8xbf16> to vector<1x16x8xbf16>
    %41 = tpu.concatenate %37, %38, %39, %40 in 0 : vector<1x16x8xbf16>, vector<1x16x8xbf16>, vector<1x16x8xbf16>, vector<1x16x8xbf16> -> vector<4x16x8xbf16>
    "tpu.trace_start"() <{level = 10 : i32, message = "hqd,hkd->hqk"}> : () -> ()
    %cst_8 = arith.constant dense<0.000000e+00> : vector<4x16x16xf32>
    %42 = tpu.matmul %23, %32, %cst_8 {dimension_numbers = #tpu.dot_dimension_numbers<[2], [2], [1], [1], [0, 0, 0, 1, 1, 1], [0], [0]>} : vector<4x16x8xbf16>, vector<4x16x8xbf16>, vector<4x16x16xf32> -> vector<4x16x16xf32>
    "tpu.trace_stop"() : () -> ()
    %c0_9 = arith.constant 0 : index
    %c0_10 = arith.constant 0 : index
    %43 = vector.load %arg2[%c0_9, %c0_10] : memref<16x16xf32, #tpu.memory_space<vmem>>, vector<16x16xf32>
    %44 = vector.shape_cast %43 : vector<16x16xf32> to vector<1x16x16xf32>
    %45 = vector.broadcast %44 : vector<1x16x16xf32> to vector<4x16x16xf32>
    %46 = arith.addf %42, %45 : vector<4x16x16xf32>
    %cst_11 = arith.constant dense<0xFF800000> : vector<4x16xf32>
    %47 = vector.multi_reduction <maximumf>, %46, %cst_11 [2] : vector<4x16x16xf32> to vector<4x16xf32>
    %48 = vector.shape_cast %47 : vector<4x16xf32> to vector<4x16x1xf32>
    %49 = vector.broadcast %48 : vector<4x16x1xf32> to vector<4x16x16xf32>
    %50 = arith.subf %46, %49 : vector<4x16x16xf32>
    %51 = math.exp %50 : vector<4x16x16xf32>
    %cst_12 = arith.constant dense<0.000000e+00> : vector<4x16xf32>
    %52 = vector.multi_reduction <add>, %51, %cst_12 [2] : vector<4x16x16xf32> to vector<4x16xf32>
    %53 = vector.shape_cast %52 : vector<4x16xf32> to vector<4x16x1xf32>
    %54 = tpu.reciprocal %53 {approx = true} : vector<4x16x1xf32> -> vector<4x16x1xf32>
    %55 = vector.broadcast %54 : vector<4x16x1xf32> to vector<4x16x16xf32>
    %56 = arith.mulf %51, %55 : vector<4x16x16xf32>
    %57 = arith.truncf %56 : vector<4x16x16xf32> to vector<4x16x16xbf16>
    "tpu.trace_start"() <{level = 10 : i32, message = "hqk,hkd->hqd"}> : () -> ()
    %cst_13 = arith.constant dense<0.000000e+00> : vector<4x16x8xf32>
    %58 = tpu.matmul %57, %41, %cst_13 {dimension_numbers = #tpu.dot_dimension_numbers<[2], [1], [1], [2], [0, 0, 0, 1, 1, 2], [0], [0]>} : vector<4x16x16xbf16>, vector<4x16x8xbf16>, vector<4x16x8xf32> -> vector<4x16x8xf32>
    "tpu.trace_stop"() : () -> ()
    %59 = vector.extract_strided_slice %58 {offsets = [0, 0, 0], sizes = [1, 16, 8], strides = [1, 1, 1]} : vector<4x16x8xf32> to vector<1x16x8xf32>
    %60 = vector.shape_cast %59 : vector<1x16x8xf32> to vector<16x8xf32>
    %61 = vector.extract_strided_slice %58 {offsets = [1, 0, 0], sizes = [1, 16, 8], strides = [1, 1, 1]} : vector<4x16x8xf32> to vector<1x16x8xf32>
    %62 = vector.shape_cast %61 : vector<1x16x8xf32> to vector<16x8xf32>
    %63 = vector.extract_strided_slice %58 {offsets = [2, 0, 0], sizes = [1, 16, 8], strides = [1, 1, 1]} : vector<4x16x8xf32> to vector<1x16x8xf32>
    %64 = vector.shape_cast %63 : vector<1x16x8xf32> to vector<16x8xf32>
    %65 = vector.extract_strided_slice %58 {offsets = [3, 0, 0], sizes = [1, 16, 8], strides = [1, 1, 1]} : vector<4x16x8xf32> to vector<1x16x8xf32>
    %66 = vector.shape_cast %65 : vector<1x16x8xf32> to vector<16x8xf32>
    %67 = tpu.concatenate %60, %62, %64, %66 in 1 : vector<16x8xf32>, vector<16x8xf32>, vector<16x8xf32>, vector<16x8xf32> -> vector<16x32xf32>
    %68 = arith.truncf %67 : vector<16x32xf32> to vector<16x32xbf16>
    %69 = vector.extract_strided_slice %5 {offsets = [0, 128], sizes = [32, 32], strides = [1, 1]} : vector<32x288xbf16> to vector<32x32xbf16>
    %cst_14 = arith.constant dense<0.000000e+00> : vector<16x32xf32>
    %70 = tpu.matmul %68, %69, %cst_14 {dimension_numbers = #tpu.dot_dimension_numbers<[1], [0], [0], [1], [0, 0, 1, 1], [], []>} : vector<16x32xbf16>, vector<32x32xbf16>, vector<16x32xf32> -> vector<16x32xf32>
    %71 = vector.extract_strided_slice %7 {offsets = [1, 0], sizes = [1, 32], strides = [1, 1]} : vector<8x128xf32> to vector<1x32xf32>
    %72 = vector.broadcast %71 : vector<1x32xf32> to vector<16x32xf32>
    %73 = arith.addf %70, %72 : vector<16x32xf32>
    %74 = arith.addf %3, %73 : vector<16x32xf32>
    %75 = vector.extract_strided_slice %7 {offsets = [4, 0], sizes = [1, 32], strides = [1, 1]} : vector<8x128xf32> to vector<1x32xf32>
    %76 = vector.extract_strided_slice %7 {offsets = [5, 0], sizes = [1, 32], strides = [1, 1]} : vector<8x128xf32> to vector<1x32xf32>
    %cst_15 = arith.constant dense<0.000000e+00> : vector<16xf32>
    %77 = vector.multi_reduction <add>, %74, %cst_15 [1] : vector<16x32xf32> to vector<16xf32>
    %78 = vector.shape_cast %77 : vector<16xf32> to vector<16x1xf32>
    %cst_16 = arith.constant 3.200000e+01 : f32
    %79 = vector.broadcast %cst_16 : f32 to vector<16x1xf32>
    %80 = arith.divf %78, %79 : vector<16x1xf32>
    %81 = vector.broadcast %80 : vector<16x1xf32> to vector<16x32xf32>
    %82 = arith.subf %74, %81 : vector<16x32xf32>
    %83 = arith.mulf %82, %82 : vector<16x32xf32>
    %cst_17 = arith.constant dense<0.000000e+00> : vector<16xf32>
    %84 = vector.multi_reduction <add>, %83, %cst_17 [1] : vector<16x32xf32> to vector<16xf32>
    %85 = vector.shape_cast %84 : vector<16xf32> to vector<16x1xf32>
    %cst_18 = arith.constant 3.200000e+01 : f32
    %86 = vector.broadcast %cst_18 : f32 to vector<16x1xf32>
    %87 = arith.divf %85, %86 : vector<16x1xf32>
    %88 = vector.broadcast %80 : vector<16x1xf32> to vector<16x32xf32>
    %89 = arith.subf %74, %88 : vector<16x32xf32>
    %cst_19 = arith.constant 9.99999996E-13 : f32
    %90 = vector.broadcast %cst_19 : f32 to vector<16x1xf32>
    %91 = arith.addf %87, %90 : vector<16x1xf32>
    %92 = math.rsqrt %91 : vector<16x1xf32>
    %93 = vector.broadcast %92 : vector<16x1xf32> to vector<16x32xf32>
    %94 = arith.mulf %89, %93 : vector<16x32xf32>
    %95 = vector.broadcast %75 : vector<1x32xf32> to vector<16x32xf32>
    %96 = arith.mulf %94, %95 : vector<16x32xf32>
    %97 = vector.broadcast %76 : vector<1x32xf32> to vector<16x32xf32>
    %98 = arith.addf %96, %97 : vector<16x32xf32>
    %99 = arith.truncf %98 : vector<16x32xf32> to vector<16x32xbf16>
    %100 = vector.extract_strided_slice %5 {offsets = [0, 160], sizes = [32, 64], strides = [1, 1]} : vector<32x288xbf16> to vector<32x64xbf16>
    %cst_20 = arith.constant dense<0.000000e+00> : vector<16x64xf32>
    %101 = tpu.matmul %99, %100, %cst_20 {dimension_numbers = #tpu.dot_dimension_numbers<[1], [0], [0], [1], [0, 0, 1, 1], [], []>} : vector<16x32xbf16>, vector<32x64xbf16>, vector<16x64xf32> -> vector<16x64xf32>
    %102 = vector.extract_strided_slice %7 {offsets = [2, 0], sizes = [1, 64], strides = [1, 1]} : vector<8x128xf32> to vector<1x64xf32>
    %103 = vector.broadcast %102 : vector<1x64xf32> to vector<16x64xf32>
    %104 = arith.addf %101, %103 : vector<16x64xf32>
    %cst_21 = arith.constant 5.000000e-01 : f32
    %105 = vector.broadcast %cst_21 : f32 to vector<16x64xf32>
    %106 = arith.mulf %105, %104 : vector<16x64xf32>
    %cst_22 = arith.constant 4.471500e-02 : f32
    %107 = vector.broadcast %cst_22 : f32 to vector<16x64xf32>
    %108 = arith.mulf %107, %104 : vector<16x64xf32>
    %109 = arith.mulf %108, %104 : vector<16x64xf32>
    %110 = arith.mulf %109, %104 : vector<16x64xf32>
    %111 = arith.addf %104, %110 : vector<16x64xf32>
    %cst_23 = arith.constant 0.797884583 : f32
    %112 = vector.broadcast %cst_23 : f32 to vector<16x64xf32>
    %113 = arith.mulf %112, %111 : vector<16x64xf32>
    %114 = math.tanh %113 : vector<16x64xf32>
    %cst_24 = arith.constant 1.000000e+00 : f32
    %115 = vector.broadcast %cst_24 : f32 to vector<16x64xf32>
    %116 = arith.addf %115, %114 : vector<16x64xf32>
    %117 = arith.mulf %106, %116 : vector<16x64xf32>
    %118 = vector.extract_strided_slice %5 {offsets = [0, 224], sizes = [32, 64], strides = [1, 1]} : vector<32x288xbf16> to vector<32x64xbf16>
    %119 = arith.truncf %117 : vector<16x64xf32> to vector<16x64xbf16>
    "tpu.trace_start"() <{level = 10 : i32, message = "mf,hf->mh"}> : () -> ()
    %cst_25 = arith.constant dense<0.000000e+00> : vector<16x32xf32>
    %120 = tpu.matmul %119, %118, %cst_25 {dimension_numbers = #tpu.dot_dimension_numbers<[1], [1], [0], [0], [0, 0, 1, 0], [], []>} : vector<16x64xbf16>, vector<32x64xbf16>, vector<16x32xf32> -> vector<16x32xf32>
    "tpu.trace_stop"() : () -> ()
    %121 = vector.extract_strided_slice %7 {offsets = [3, 0], sizes = [1, 32], strides = [1, 1]} : vector<8x128xf32> to vector<1x32xf32>
    %122 = vector.broadcast %121 : vector<1x32xf32> to vector<16x32xf32>
    %123 = arith.addf %120, %122 : vector<16x32xf32>
    %124 = arith.addf %98, %123 : vector<16x32xf32>
    %125 = vector.extract_strided_slice %7 {offsets = [6, 0], sizes = [1, 32], strides = [1, 1]} : vector<8x128xf32> to vector<1x32xf32>
    %126 = vector.extract_strided_slice %7 {offsets = [7, 0], sizes = [1, 32], strides = [1, 1]} : vector<8x128xf32> to vector<1x32xf32>
    %cst_26 = arith.constant dense<0.000000e+00> : vector<16xf32>
    %127 = vector.multi_reduction <add>, %124, %cst_26 [1] : vector<16x32xf32> to vector<16xf32>
    %128 = vector.shape_cast %127 : vector<16xf32> to vector<16x1xf32>
    %cst_27 = arith.constant 3.200000e+01 : f32
    %129 = vector.broadcast %cst_27 : f32 to vector<16x1xf32>
    %130 = arith.divf %128, %129 : vector<16x1xf32>
    %131 = vector.broadcast %130 : vector<16x1xf32> to vector<16x32xf32>
    %132 = arith.subf %124, %131 : vector<16x32xf32>
    %133 = arith.mulf %132, %132 : vector<16x32xf32>
    %cst_28 = arith.constant dense<0.000000e+00> : vector<16xf32>
    %134 = vector.multi_reduction <add>, %133, %cst_28 [1] : vector<16x32xf32> to vector<16xf32>
    %135 = vector.shape_cast %134 : vector<16xf32> to vector<16x1xf32>
    %cst_29 = arith.constant 3.200000e+01 : f32
    %136 = vector.broadcast %cst_29 : f32 to vector<16x1xf32>
    %137 = arith.divf %135, %136 : vector<16x1xf32>
    %138 = vector.broadcast %130 : vector<16x1xf32> to vector<16x32xf32>
    %139 = arith.subf %124, %138 : vector<16x32xf32>
    %cst_30 = arith.constant 9.99999996E-13 : f32
    %140 = vector.broadcast %cst_30 : f32 to vector<16x1xf32>
    %141 = arith.addf %137, %140 : vector<16x1xf32>
    %142 = math.rsqrt %141 : vector<16x1xf32>
    %143 = vector.broadcast %142 : vector<16x1xf32> to vector<16x32xf32>
    %144 = arith.mulf %139, %143 : vector<16x32xf32>
    %145 = vector.broadcast %125 : vector<1x32xf32> to vector<16x32xf32>
    %146 = arith.mulf %144, %145 : vector<16x32xf32>
    %147 = vector.broadcast %126 : vector<1x32xf32> to vector<16x32xf32>
    %148 = arith.addf %146, %147 : vector<16x32xf32>
    %c0_31 = arith.constant 0 : index
    %c0_32 = arith.constant 0 : index
    %149 = vector.load %arg10[%c0_31, %c0_32] : memref<16x32xf32, #tpu.memory_space<vmem>>, vector<16x32xf32>
    tpu.vector_store %arg10[%c0_31, %c0_32], %148 {strides = array<i32>} : memref<16x32xf32, #tpu.memory_space<vmem>>, vector<16x32xf32>,
    %c1_i32 = arith.constant 1 : i32
    %150 = arith.cmpi eq, %arg0, %c1_i32 : i32
    %151 = arith.extui %150 : i1 to i32
    %c0_i32_33 = arith.constant 0 : i32
    %152 = arith.cmpi ne, %151, %c0_i32_33 : i32
    scf.if %152 {
      %c0_34 = arith.constant 0 : index
      %c0_35 = arith.constant 0 : index
      %153 = vector.load %arg7[%c0_34, %c0_35] : memref<3x128xf32, #tpu.memory_space<vmem>>, vector<3x128xf32>
      %c0_36 = arith.constant 0 : index
      %c0_37 = arith.constant 0 : index
      %154 = vector.load %arg3[%c0_36, %c0_37] : memref<2x16xf32, #tpu.memory_space<vmem>>, vector<2x16xf32>
      %cst_38 = arith.constant dense<0.000000e+00> : vector<2x32xf32>
      %155 = tpu.matmul %154, %148, %cst_38 {dimension_numbers = #tpu.dot_dimension_numbers<[1], [0], [0], [1], [0, 0, 1, 1], [], []>} : vector<2x16xf32>, vector<16x32xf32>, vector<2x32xf32> -> vector<2x32xf32>
      %c0_39 = arith.constant 0 : index
      %c0_40 = arith.constant 0 : index
      %156 = vector.load %arg6[%c0_39, %c0_40] : memref<32x128xf32, #tpu.memory_space<vmem>>, vector<32x128xf32>
      %cst_41 = arith.constant dense<0.000000e+00> : vector<2x128xf32>
      %157 = tpu.matmul %155, %156, %cst_41 {dimension_numbers = #tpu.dot_dimension_numbers<[1], [0], [0], [1], [0, 0, 1, 1], [], []>} : vector<2x32xf32>, vector<32x128xf32>, vector<2x128xf32> -> vector<2x128xf32>
      %158 = vector.extract_strided_slice %153 {offsets = [0, 0], sizes = [1, 128], strides = [1, 1]} : vector<3x128xf32> to vector<1x128xf32>
      %159 = vector.broadcast %158 : vector<1x128xf32> to vector<2x128xf32>
      %160 = arith.addf %157, %159 : vector<2x128xf32>
      %c0_42 = arith.constant 0 : index
      %c0_43 = arith.constant 0 : index
      %161 = vector.load %arg8[%c0_42, %c0_43] : memref<2x128xf32, #tpu.memory_space<vmem>>, vector<2x128xf32>
      tpu.vector_store %arg8[%c0_42, %c0_43], %160 {strides = array<i32>} : memref<2x128xf32, #tpu.memory_space<vmem>>, vector<2x128xf32>,
      %162 = vector.extract_strided_slice %160 {offsets = [0, 0], sizes = [2, 3], strides = [1, 1]} : vector<2x128xf32> to vector<2x3xf32>
      %163 = vector.extract_strided_slice %153 {offsets = [1, 0], sizes = [2, 3], strides = [1, 1]} : vector<3x128xf32> to vector<2x3xf32>
      %cst_44 = arith.constant 0.000000e+00 : f32
      %164 = vector.broadcast %cst_44 : f32 to vector<2x3xf32>
      %165 = arith.maximumf %162, %164 : vector<2x3xf32>
      %166 = arith.mulf %162, %163 : vector<2x3xf32>
      %167 = arith.subf %165, %166 : vector<2x3xf32>
      %168 = math.absf %162 : vector<2x3xf32>
      %cst_45 = arith.constant 0.000000e+00 : f32
      %169 = vector.broadcast %cst_45 : f32 to vector<2x3xf32>
      %170 = arith.subf %169, %168 : vector<2x3xf32>
      %171 = math.exp %170 : vector<2x3xf32>
      %cst_46 = arith.constant 1.000000e+00 : f32
      %172 = vector.broadcast %cst_46 : f32 to vector<2x3xf32>
      %173 = arith.addf %172, %171 : vector<2x3xf32>
      %174 = math.log %173 : vector<2x3xf32>
      %175 = arith.addf %167, %174 : vector<2x3xf32>
      %176 = vector.shape_cast %175 : vector<2x3xf32> to vector<1x2x3xf32>
      %cst_47 = arith.constant dense<0.000000e+00> : vector<1xf32>
      %177 = vector.multi_reduction <add>, %176, %cst_47 [1, 2] : vector<1x2x3xf32> to vector<1xf32>
      %178 = vector.shape_cast %177 : vector<1xf32> to vector<1x1x1xf32>
      %179 = vector.extract %178[0, 0, 0] : f32 from vector<1x1x1xf32>
      %cst_48 = arith.constant 6.000000e+00 : f32
      %180 = arith.divf %179, %cst_48 : f32
      %181 = vector.broadcast %180 : f32 to vector<1x1xf32>
      %c0_49 = arith.constant 0 : index
      %c0_50 = arith.constant 0 : index
      %182 = vector.load %arg9[%c0_49, %c0_50] : memref<1x1xf32, #tpu.memory_space<vmem>>, vector<1x1xf32>
      tpu.vector_store %arg9[%c0_49, %c0_50], %181 {strides = array<i32>} : memref<1x1xf32, #tpu.memory_space<vmem>>, vector<1x1xf32>,
    } else {
    }
    return
  }
  func.func @transform_0(%arg0: i32) -> (i32, i32) {
    %c0_i32 = arith.constant 0 : i32
    %c0_i32_0 = arith.constant 0 : i32
    %c0_i32_1 = arith.constant 0 : i32
    return %c0_i32, %c0_i32_0 : i32, i32
  }
  func.func @transform_1(%arg0: i32) -> (i32, i32) {
    %c0_i32 = arith.constant 0 : i32
    %c0_i32_0 = arith.constant 0 : i32
    %c0_i32_1 = arith.constant 0 : i32
    return %c0_i32, %c0_i32_0 : i32, i32
  }
  func.func @transform_2(%arg0: i32) -> (i32, i32) {
    %c0_i32 = arith.constant 0 : i32
    %c0_i32_0 = arith.constant 0 : i32
    %c0_i32_1 = arith.constant 0 : i32
    return %c0_i32, %c0_i32_0 : i32, i32
  }
  func.func @transform_3(%arg0: i32) -> (i32, i32, i32) {
    %c0_i32 = arith.constant 0 : i32
    %c0_i32_0 = arith.constant 0 : i32
    %c0_i32_1 = arith.constant 0 : i32
    return %arg0, %c0_i32, %c0_i32_0 : i32, i32, i32
  }
  func.func @transform_4(%arg0: i32) -> (i32, i32, i32) {
    %c0_i32 = arith.constant 0 : i32
    %c0_i32_0 = arith.constant 0 : i32
    %c0_i32_1 = arith.constant 0 : i32
    return %arg0, %c0_i32, %c0_i32_0 : i32, i32, i32
  }
  func.func @transform_5(%arg0: i32) -> (i32, i32) {
    %c0_i32 = arith.constant 0 : i32
    %c0_i32_0 = arith.constant 0 : i32
    %c0_i32_1 = arith.constant 0 : i32
    return %c0_i32, %c0_i32_0 : i32, i32
  }
  func.func @transform_6(%arg0: i32) -> (i32, i32) {
    %c0_i32 = arith.constant 0 : i32
    %c0_i32_0 = arith.constant 0 : i32
    %c0_i32_1 = arith.constant 0 : i32
    return %c0_i32, %c0_i32_0 : i32, i32
  }
  func.func @transform_7(%arg0: i32) -> (i32, i32) {
    %c0_i32 = arith.constant 0 : i32
    %c0_i32_0 = arith.constant 0 : i32
    %c0_i32_1 = arith.constant 0 : i32
    return %c0_i32, %c0_i32_0 : i32, i32
  }
  func.func @transform_8(%arg0: i32) -> (i32, i32) {
    %c0_i32 = arith.constant 0 : i32
    %c0_i32_0 = arith.constant 0 : i32
    %c0_i32_1 = arith.constant 0 : i32
    return %c0_i32, %c0_i32_0 : i32, i32
  }
}

</mosaic_0001>

<llo_original>
// kernel: bert_multilabel_forward.1
$region0: #{bert_multilabel_forward.1}
  #allocation0 [shape = 'u32[]', space=smem, size = 0x4, offset = 0x4, fixed_abs, tag = 'smem constant byte address 0x4 - core index']
  #allocation1 [shape = 'u32[144,128]{1,0:T(1,128)}', space=vmem, size = 0x12000, scoped, tag = 'internal scratch']
  #allocation2 [shape = 'f32[16,32]{1,0:T(8,128)}', space=vmem, size = 0x2000, scoped, tag = 'scratch operand']
  %s0 = inlined_call_operand.vmem [shape: f32[16,32], index: 0, kind: input, shape index: {}]
  %s1 = inlined_call_operand.vmem [shape: f32[16,16], index: 1, kind: input, shape index: {}]
  %s2 = inlined_call_operand.vmem [shape: f32[2,16], index: 2, kind: input, shape index: {}]
  %s3 = inlined_call_operand.vmem [shape: bf16[2,32,288], index: 3, kind: input, shape index: {}]
  %s4 = inlined_call_operand.vmem [shape: f32[2,8,128], index: 4, kind: input, shape index: {}]
  %s5 = inlined_call_operand.vmem [shape: f32[32,128], index: 5, kind: input, shape index: {}]
  %s6 = inlined_call_operand.vmem [shape: f32[3,128], index: 6, kind: input, shape index: {}]
  %s7 = inlined_call_operand.hbm [shape: f32[2,128], index: 7, kind: output, shape index: {0}]
  %s8 = inlined_call_operand.hbm [shape: f32[1,1], index: 8, kind: output, shape index: {1}]
  %9 = xla_tuple %s7, %s8
  %s10 = sld [smem:[#allocation0]]
  $region77: #{bert_multilabel_forward.1} parent=0
    _
  %s12 = ssub.s32 1, %s10
  %s13 = scalar_select 0, %s12, %s10
  $region1: #{bert_multilabel_forward.1} parent=0
    #allocation3 [shape = 'u8[1024]{0}', space=vmem, size = 0x400, scoped, tag = 'output window, operand 0, single buffered']
    #allocation4 [shape = 's32[2]{0}', space=sflag, size = 0x8, scoped, tag = 'scoped memory for bert_multilabel_forward.1']
    #allocation5 [shape = 'u8[512]{0}', space=vmem, size = 0x400, scoped, tag = 'output window, operand 1, single buffered']
    #allocation6 [shape = 's32[1]{0}', space=sflag, size = 0x4, scoped, tag = 'scoped memory for bert_multilabel_forward.1']
    %14 = vsyncpa [#allocation4], 0
    %15 = vsyncpa [#allocation6], 0
    loop: start=0, step=1, limit=4
    $region2: #{bert_multilabel_forward.1} parent=1 // loop_pre_header
      _
    $region3: #{bert_multilabel_forward.1} parent=1 // loop_header
      %s17 = sphi 0, %s21
      %p18 = scmp.ge.s32.totalorder %s17, 4
      %s25 = sphi 0, %s25
      %s27 = sphi 0, %s25
      %s28 = sphi 0, %s27
      %s42 = sphi 0, %s28
      %s46 = sphi 0, %s46
      %s48 = sphi 0, %s46
      %s49 = sphi 0, %s48
      %s63 = sphi 0, %s49
      %s67 = sphi 0, %s67
      %s69 = sphi 0, %s67
      %s70 = sphi 0, %s69
      %s84 = sphi 0, %s70
      %s90 = sphi 0, %s92
      %s93 = sphi 0, %s90
      %s94 = sphi 0, %s93
      %s110 = sphi 0, %s94
      %s116 = sphi 0, %s118
      %s119 = sphi 0, %s116
      %s120 = sphi 0, %s119
      %s136 = sphi 0, %s120
      %s140 = sphi 0, %s140
      %s142 = sphi 0, %s140
      %s143 = sphi 0, %s142
      %s157 = sphi 0, %s143
      %s161 = sphi 0, %s161
      %s163 = sphi 0, %s161
      %s164 = sphi 0, %s163
      %s178 = sphi 0, %s164
      %s182 = sphi 0, %s182
      %s184 = sphi 0, %s182
      %s185 = sphi 0, %s184
      %s199 = sphi 0, %s185
      %s203 = sphi 0, %s203
      %s205 = sphi 0, %s203
      %s206 = sphi 0, %s205
      %s220 = sphi 0, %s206
    $region4: #{bert_multilabel_forward.1} parent=1 // loop_header_branch
      %20 = sbr.rel (%p18) target = $region8
    $region5: #{bert_multilabel_forward.1} parent=1 // loop_body
      %s22 = ssub.s32 %s17, 1
      %s23 = ssub.s32 %s17, 2
      %s24 = sadd.s32 %s17, 1
      %s26 = sadd.s32 %s25, 1
      %p29 = scmp.eq.s32.totalorder %s17, 1
      %p30 = scmp.ne.s32.totalorder %s25, %s27
      %p31 = scmp.eq.s32.totalorder %s17, 0
      %p32 = por %p30, %p31
      %p33 = scmp.ne.s32.totalorder %s25, %s27
      %p34 = scmp.eq.s32.totalorder %s22, 1
      %p35 = por %p33, %p34
      %p36 = scmp.ne.s32.totalorder %s27, %s28
      %p37 = scmp.eq.s32.totalorder %s22, 0
      %p38 = por %p36, %p37
      %p39 = scmp.ne.s32.totalorder %s27, %s28
      %p40 = scmp.eq.s32.totalorder %s23, 1
      %p41 = por %p39, %p40
      %p43 = scmp.ne.s32.totalorder %s28, %s42
      %p44 = scmp.eq.s32.totalorder %s23, 0
      %p45 = por %p43, %p44
      %s47 = sadd.s32 %s46, 1
      %p50 = scmp.eq.s32.totalorder %s17, 1
      %p51 = scmp.ne.s32.totalorder %s46, %s48
      %p52 = scmp.eq.s32.totalorder %s17, 0
      %p53 = por %p51, %p52
      %p54 = scmp.ne.s32.totalorder %s46, %s48
      %p55 = scmp.eq.s32.totalorder %s22, 1
      %p56 = por %p54, %p55
      %p57 = scmp.ne.s32.totalorder %s48, %s49
      %p58 = scmp.eq.s32.totalorder %s22, 0
      %p59 = por %p57, %p58
      %p60 = scmp.ne.s32.totalorder %s48, %s49
      %p61 = scmp.eq.s32.totalorder %s23, 1
      %p62 = por %p60, %p61
      %p64 = scmp.ne.s32.totalorder %s49, %s63
      %p65 = scmp.eq.s32.totalorder %s23, 0
      %p66 = por %p64, %p65
      %s68 = sadd.s32 %s67, 1
      %p71 = scmp.eq.s32.totalorder %s17, 1
      %p72 = scmp.ne.s32.totalorder %s67, %s69
      %p73 = scmp.eq.s32.totalorder %s17, 0
      %p74 = por %p72, %p73
      %p75 = scmp.ne.s32.totalorder %s67, %s69
      %p76 = scmp.eq.s32.totalorder %s22, 1
      %p77 = por %p75, %p76
      %p78 = scmp.ne.s32.totalorder %s69, %s70
      %p79 = scmp.eq.s32.totalorder %s22, 0
      %p80 = por %p78, %p79
      %p81 = scmp.ne.s32.totalorder %s69, %s70
      %p82 = scmp.eq.s32.totalorder %s23, 1
      %p83 = por %p81, %p82
      %p85 = scmp.ne.s32.totalorder %s70, %s84
      %p86 = scmp.eq.s32.totalorder %s23, 0
      %p87 = por %p85, %p86
      %s88 = ssub.s32 %s17, %s24
      %p89 = scmp.eq.s32.totalorder %s88, 0
      %s91 = sadd.s32 %s90, 1
      %s92 = scalar_select %p89, %s90, %s91
      %p95 = pneg %p89
      %p96 = scmp.eq.s32.totalorder %s17, 1
      %p97 = por %p95, %p96
      %p98 = scmp.ne.s32.totalorder %s90, %s93
      %p99 = scmp.eq.s32.totalorder %s17, 0
      %p100 = por %p98, %p99
      %p101 = scmp.ne.s32.totalorder %s90, %s93
      %p102 = scmp.eq.s32.totalorder %s22, 1
      %p103 = por %p101, %p102
      %p104 = scmp.ne.s32.totalorder %s93, %s94
      %p105 = scmp.eq.s32.totalorder %s22, 0
      %p106 = por %p104, %p105
      %p107 = scmp.ne.s32.totalorder %s93, %s94
      %p108 = scmp.eq.s32.totalorder %s23, 1
      %p109 = por %p107, %p108
      %p111 = scmp.ne.s32.totalorder %s94, %s110
      %p112 = scmp.eq.s32.totalorder %s23, 0
      %p113 = por %p111, %p112
      %s114 = ssub.s32 %s17, %s24
      %p115 = scmp.eq.s32.totalorder %s114, 0
      %s117 = sadd.s32 %s116, 1
      %s118 = scalar_select %p115, %s116, %s117
      %p121 = pneg %p115
      %p122 = scmp.eq.s32.totalorder %s17, 1
      %p123 = por %p121, %p122
      %p124 = scmp.ne.s32.totalorder %s116, %s119
      %p125 = scmp.eq.s32.totalorder %s17, 0
      %p126 = por %p124, %p125
      %p127 = scmp.ne.s32.totalorder %s116, %s119
      %p128 = scmp.eq.s32.totalorder %s22, 1
      %p129 = por %p127, %p128
      %p130 = scmp.ne.s32.totalorder %s119, %s120
      %p131 = scmp.eq.s32.totalorder %s22, 0
      %p132 = por %p130, %p131
      %p133 = scmp.ne.s32.totalorder %s119, %s120
      %p134 = scmp.eq.s32.totalorder %s23, 1
      %p135 = por %p133, %p134
      %p137 = scmp.ne.s32.totalorder %s120, %s136
      %p138 = scmp.eq.s32.totalorder %s23, 0
      %p139 = por %p137, %p138
      %s141 = sadd.s32 %s140, 1
      %p144 = scmp.eq.s32.totalorder %s17, 1
      %p145 = scmp.ne.s32.totalorder %s140, %s142
      %p146 = scmp.eq.s32.totalorder %s17, 0
      %p147 = por %p145, %p146
      %p148 = scmp.ne.s32.totalorder %s140, %s142
      %p149 = scmp.eq.s32.totalorder %s22, 1
      %p150 = por %p148, %p149
      %p151 = scmp.ne.s32.totalorder %s142, %s143
      %p152 = scmp.eq.s32.totalorder %s22, 0
      %p153 = por %p151, %p152
      %p154 = scmp.ne.s32.totalorder %s142, %s143
      %p155 = scmp.eq.s32.totalorder %s23, 1
      %p156 = por %p154, %p155
      %p158 = scmp.ne.s32.totalorder %s143, %s157
      %p159 = scmp.eq.s32.totalorder %s23, 0
      %p160 = por %p158, %p159
      %s162 = sadd.s32 %s161, 1
      %p165 = scmp.eq.s32.totalorder %s17, 1
      %p166 = scmp.ne.s32.totalorder %s161, %s163
      %p167 = scmp.eq.s32.totalorder %s17, 0
      %p168 = por %p166, %p167
      %p169 = scmp.ne.s32.totalorder %s161, %s163
      %p170 = scmp.eq.s32.totalorder %s22, 1
      %p171 = por %p169, %p170
      %p172 = scmp.ne.s32.totalorder %s163, %s164
      %p173 = scmp.eq.s32.totalorder %s22, 0
      %p174 = por %p172, %p173
      %p175 = scmp.ne.s32.totalorder %s163, %s164
      %p176 = scmp.eq.s32.totalorder %s23, 1
      %p177 = por %p175, %p176
      %p179 = scmp.ne.s32.totalorder %s164, %s178
      %p180 = scmp.eq.s32.totalorder %s23, 0
      %p181 = por %p179, %p180
      %s183 = sadd.s32 %s182, 1
      %p186 = scmp.eq.s32.totalorder %s17, 1
      %p187 = scmp.ne.s32.totalorder %s182, %s184
      %p188 = scmp.eq.s32.totalorder %s17, 0
      %p189 = por %p187, %p188
      %p190 = scmp.ne.s32.totalorder %s182, %s184
      %p191 = scmp.eq.s32.totalorder %s22, 1
      %p192 = por %p190, %p191
      %p193 = scmp.ne.s32.totalorder %s184, %s185
      %p194 = scmp.eq.s32.totalorder %s22, 0
      %p195 = por %p193, %p194
      %p196 = scmp.ne.s32.totalorder %s184, %s185
      %p197 = scmp.eq.s32.totalorder %s23, 1
      %p198 = por %p196, %p197
      %p200 = scmp.ne.s32.totalorder %s185, %s199
      %p201 = scmp.eq.s32.totalorder %s23, 0
      %p202 = por %p200, %p201
      %s204 = sadd.s32 %s203, 1
      %p207 = scmp.eq.s32.totalorder %s17, 1
      %p208 = scmp.ne.s32.totalorder %s203, %s205
      %p209 = scmp.eq.s32.totalorder %s17, 0
      %p210 = por %p208, %p209
      %p211 = scmp.ne.s32.totalorder %s203, %s205
      %p212 = scmp.eq.s32.totalorder %s22, 1
      %p213 = por %p211, %p212
      %p214 = scmp.ne.s32.totalorder %s205, %s206
      %p215 = scmp.eq.s32.totalorder %s22, 0
      %p216 = por %p214, %p215
      %p217 = scmp.ne.s32.totalorder %s205, %s206
      %p218 = scmp.eq.s32.totalorder %s23, 1
      %p219 = por %p217, %p218
      %p221 = scmp.ne.s32.totalorder %s206, %s220
      %p222 = scmp.eq.s32.totalorder %s23, 0
      %p223 = por %p221, %p222
      %p224 = scmp.le.s32.totalorder 1, %s17
      %p225 = scmp.lt.s32.totalorder %s17, 3
      %p226 = pnand %p224, %p225
      %p227 = pneg %p226
      // Predicated region
      $region9: #{bert_multilabel_forward.1} parent=5 // pred_check
        _
      $region10: #{bert_multilabel_forward.1} parent=5 // pred_check_branch
        %229 = sbr.rel (%p226) target = $region12
      $region11: #{bert_multilabel_forward.1} parent=5 // pred_region
        %s230 = ssub.s32 %s17, 1
        // Predicated region
        $region13: #{bert_multilabel_forward.1} parent=11 // pred_check
          %p231 = pneg %p38
        $region14: #{bert_multilabel_forward.1} parent=11 // pred_check_branch
          %233 = sbr.rel (%p231) target = $region16
        $region15: #{bert_multilabel_forward.1} parent=11 // pred_region
          _
        $region16: #{bert_multilabel_forward.1} parent=11 // pred_fallthru
          _
        // Predicated region
        $region17: #{bert_multilabel_forward.1} parent=11 // pred_check
          %p234 = pneg %p59
        $region18: #{bert_multilabel_forward.1} parent=11 // pred_check_branch
          %236 = sbr.rel (%p234) target = $region20
        $region19: #{bert_multilabel_forward.1} parent=11 // pred_region
          _
        $region20: #{bert_multilabel_forward.1} parent=11 // pred_fallthru
          _
        // Predicated region
        $region21: #{bert_multilabel_forward.1} parent=11 // pred_check
          %p237 = pneg %p80
        $region22: #{bert_multilabel_forward.1} parent=11 // pred_check_branch
          %239 = sbr.rel (%p237) target = $region24
        $region23: #{bert_multilabel_forward.1} parent=11 // pred_region
          _
        $region24: #{bert_multilabel_forward.1} parent=11 // pred_fallthru
          _
        // Predicated region
        $region25: #{bert_multilabel_forward.1} parent=11 // pred_check
          %p240 = pneg %p153
        $region26: #{bert_multilabel_forward.1} parent=11 // pred_check_branch
          %242 = sbr.rel (%p240) target = $region28
        $region27: #{bert_multilabel_forward.1} parent=11 // pred_region
          _
        $region28: #{bert_multilabel_forward.1} parent=11 // pred_fallthru
          _
        // Predicated region
        $region29: #{bert_multilabel_forward.1} parent=11 // pred_check
          %p243 = pneg %p174
        $region30: #{bert_multilabel_forward.1} parent=11 // pred_check_branch
          %245 = sbr.rel (%p243) target = $region32
        $region31: #{bert_multilabel_forward.1} parent=11 // pred_region
          _
        $region32: #{bert_multilabel_forward.1} parent=11 // pred_fallthru
          _
      $region12: #{bert_multilabel_forward.1} parent=5 // pred_fallthru
        _
      %p246 = scmp.lt.s32.totalorder %s17, 2
      // Predicated region
      $region33: #{bert_multilabel_forward.1} parent=5 // pred_check
        %p247 = pneg %p246
      $region34: #{bert_multilabel_forward.1} parent=5 // pred_check_branch
        %249 = sbr.rel (%p247) target = $region36
      $region35: #{bert_multilabel_forward.1} parent=5 // pred_region
        // Predicated region
        $region37: #{bert_multilabel_forward.1} parent=35 // pred_check
          %p250 = pneg %p100
        $region38: #{bert_multilabel_forward.1} parent=35 // pred_check_branch
          %252 = sbr.rel (%p250) target = $region40
        $region39: #{bert_multilabel_forward.1} parent=35 // pred_region
          %p253 = scmp.lt.s32.totalorder %s17, 1
          %s254 = scalar_select %p253, %s17, 1
          %s255 = smul.addr %s254, 12
          %s256 = smul.addr %s255, 4
          %s257 = scalar_lea.vmem %s3, %s256
        $region40: #{bert_multilabel_forward.1} parent=35 // pred_fallthru
          _
        // Predicated region
        $region41: #{bert_multilabel_forward.1} parent=35 // pred_check
          %p258 = pneg %p126
        $region42: #{bert_multilabel_forward.1} parent=35 // pred_check_branch
          %260 = sbr.rel (%p258) target = $region44
        $region43: #{bert_multilabel_forward.1} parent=35 // pred_region
          %p261 = scmp.lt.s32.totalorder %s17, 1
          %s262 = scalar_select %p261, %s17, 1
          %s263 = smul.addr %s262, 8
          %s264 = scalar_lea.vmem %s4, %s263
        $region44: #{bert_multilabel_forward.1} parent=35 // pred_fallthru
          _
      $region36: #{bert_multilabel_forward.1} parent=5 // pred_fallthru
        _
      %p265 = scmp.le.s32.totalorder 1, %s17
      %p266 = scmp.lt.s32.totalorder %s17, 3
      %p267 = pnand %p265, %p266
      %p268 = pneg %p267
      // Predicated region
      $region45: #{bert_multilabel_forward.1} parent=5 // pred_check
        _
      $region46: #{bert_multilabel_forward.1} parent=5 // pred_check_branch
        %270 = sbr.rel (%p267) target = $region48
      $region47: #{bert_multilabel_forward.1} parent=5 // pred_region
        %s271 = ssub.s32 %s17, 1
        %p272 = pneg %p38
        %p273 = pneg %p35
        %p274 = pneg %p59
        %p275 = pneg %p56
        %p276 = pneg %p80
        %p277 = pneg %p77
        %p278 = scmp.lt.s32.totalorder %s22, 1
        %s279 = scalar_select %p278, %s22, 1
        %s280 = smul.addr %s279, 12
        %s281 = smul.addr %s280, 4
        %s282 = scalar_lea.vmem %s3, %s281
        %p283 = pneg %p106
        %p284 = pneg %p103
        %p285 = scmp.lt.s32.totalorder %s22, 1
        %s286 = scalar_select %p285, %s22, 1
        %s287 = smul.addr %s286, 8
        %s288 = scalar_lea.vmem %s4, %s287
        %p289 = pneg %p132
        %p290 = pneg %p129
        %p291 = pneg %p153
        %p292 = pneg %p150
        %p293 = pneg %p174
        %p294 = pneg %p171
        %p295 = pneg %p195
        %p296 = pneg %p192
        %p297 = pneg %p216
        %p298 = pneg %p213
        %p299 = scmp.lt.s32.totalorder %s22, 1
        %s300 = scalar_select %p299, %s22, 1
        %s301 = smul.addr %s300, 12
        %s302 = smul.addr %s301, 4
        %s303 = scalar_lea.vmem %s3, %s302
        %p304 = scmp.lt.s32.totalorder %s22, 1
        %s305 = scalar_select %p304, %s22, 1
        %s306 = smul.addr %s305, 8
        %s307 = scalar_lea.vmem %s4, %s306
        %p309 = scmp.eq.s32.totalorder %s22, 0
        // Predicated region
        $region49: #{bert_multilabel_forward.1} parent=47 // pred_check
          %p310 = pneg %p309
        $region50: #{bert_multilabel_forward.1} parent=47 // pred_check_branch
          %312 = sbr.rel (%p310) target = $region52
        $region51: #{bert_multilabel_forward.1} parent=47 // pred_region
          %v313 = vld [vmem:[%s0] sm:$0xff]
          %v314 = vld [vmem:[%s0 + $0x8] sm:$0xff]
          %vm315 = vcmask 261120
          %316 = vst.msk [vmem:[#allocation2] sm:$0xff] %vm315, %v313
          %317 = vst.msk [vmem:[#allocation2 + $0x8] sm:$0xff] %vm315, %v314
        $region52: #{bert_multilabel_forward.1} parent=47 // pred_fallthru
          _
        %v318 = vld [vmem:[#allocation2] sm:$0xff]
        %v319 = vld [vmem:[#allocation2 + $0x8] sm:$0xff]
        %v320 = vld [vmem:[%s303] sm:$0xff]
        %v321 = vld [vmem:[%s303 + $0x8] sm:$0xf]
        %v322 = vld [vmem:[%s303 + $0xc] sm:$0xff]
        %v323 = vld [vmem:[%s303 + $0x14] sm:$0xf]
        %v324 = vld [vmem:[%s303 + $0x18] sm:$0xff]
        %v325 = vld [vmem:[%s303 + $0x20] sm:$0xf]
        %v326 = vld [vmem:[%s303 + $0x24] sm:$0xff]
        %v327 = vld [vmem:[%s303 + $0x2c] sm:$0xf]
        %v328 = vld [vmem:[%s307] sm:$0xff]
        %v329 = vpack.c.bf16 %v319, %v318
        %v330 = vlaneseq
        %v331 = vshrl.u32 %v330, 7
        %v332 = vsub.s32 0, %v331
        %v333 = vrot.slane %v328, %v332
        %v338 = vunpack.c.l.b16 %v320
        %v339 = vunpack.c.l.b16 %v322
        %v340 = vunpack.c.l.b16 %v324
        %v341 = vunpack.c.l.b16 %v326
        %v342 = vpack.c.b16 %v339, %v338
        %v343 = vpack.c.b16 %v341, %v340
        %vm346 = vcmask 261120
        %v348 = vsel %vm346, %v329, 0
        %350 = vmatprep.subr.bf16.mxu0 0
        %351 = vmatpush1.bf16.msra.mxu0 %v342
        %352 = vmatprep.subr.bf16.mxu0 0
        %353 = vmatpush1.bf16.msra.mxu0 %v343
        %354 = vmatprep.subr.bf16.mxu0 0
        %355 = vmatpush1.bf16.msra.mxu0 0
        %356 = vmatprep.subr.bf16.mxu0 0
        %357 = vmatpush1.bf16.msra.mxu0 0
        %358 = vmatprep.subr.bf16.mxu0 0
        %359 = vmatpush1.bf16.msra.mxu0 0
        %360 = vmatprep.subr.bf16.mxu0 0
        %361 = vmatpush1.bf16.msra.mxu0 0
        %362 = vmatprep.subr.bf16.mxu0 0
        %363 = vmatpush1.bf16.msra.mxu0 0
        %364 = vmatprep.subr.bf16.mxu0 0
        %365 = vmatpush1.bf16.msra.mxu0 0
        %366 = vmatprep.subr.bf16.mxu0 0
        %367 = vmatpush1.bf16.msra.mxu0 0
        %368 = vmatprep.subr.bf16.mxu0 0
        %369 = vmatpush1.bf16.msra.mxu0 0
        %370 = vmatprep.subr.bf16.mxu0 0
        %371 = vmatpush1.bf16.msra.mxu0 0
        %372 = vmatprep.subr.bf16.mxu0 0
        %373 = vmatpush1.bf16.msra.mxu0 0
        %374 = vmatprep.subr.bf16.mxu0 0
        %375 = vmatpush1.bf16.msra.mxu0 0
        %376 = vmatprep.subr.bf16.mxu0 0
        %377 = vmatpush1.bf16.msra.mxu0 0
        %378 = vmatprep.subr.bf16.mxu0 0
        %379 = vmatpush1.bf16.msra.mxu0 0
        %380 = vmatprep.subr.bf16.mxu0 0
        %381 = vmatpush1.bf16.msra.mxu0 0
        %382 = vmatprep.mubr.bf16.mxu0 0
        %383 = vmatmul.mubr.bf16.gmra.mrb[0].mxu0 %v348
        %v384 = vpop.f32.mrb[0].mxu0
        %v385 = vadd.f32 %v333, %v384
        %v386 = vpop.f32.mrb[0].mxu0
        %v387 = vpop.f32.mrb[0].mxu0
        %v388 = vadd.f32 %v333, %v387
        %v389 = vpop.f32.mrb[0].mxu0
        %390 = vdwg.mxu0
        %v391 = vpack.c.bf16 %v388, %v385
        %393 = vrot.lane.b32.xlu0 %v391, 120
        %v394 = vpop.permute.xlu0 %393
        %395 = vrot.lane.b32.xlu0 %v391, 112
        %v396 = vpop.permute.xlu0 %395
        %397 = vrot.lane.b32.xlu0 %v391, 104
        %v398 = vpop.permute.xlu0 %397
        %v399 = vld [vmem:[%s1] sm:$0xff]
        %v400 = vld [vmem:[%s1 + $0x8] sm:$0xff]
        %401 = vrot.lane.b32.xlu0 %v391, 96
        %v402 = vpop.permute.xlu0 %401
        %vm403 = vcmask 64512
        %v405 = vsel %vm403, %v391, 0
        %v408 = vsel %vm403, %v402, 0
        %410 = vmatprep.subr.bf16.mxu0 0
        %411 = vmatpush1.bf16.xpose.msra.mxu0 %v408
        %412 = vmatprep.subr.bf16.mxu0 0
        %413 = vmatpush1.bf16.xpose.msra.mxu0 0
        %414 = vmatprep.subr.bf16.mxu0 0
        %415 = vmatpush1.bf16.xpose.msra.mxu0 0
        %416 = vmatprep.subr.bf16.mxu0 0
        %417 = vmatpush1.bf16.xpose.msra.mxu0 0
        %418 = vmatprep.subr.bf16.mxu0 0
        %419 = vmatpush1.bf16.xpose.msra.mxu0 0
        %420 = vmatprep.subr.bf16.mxu0 0
        %421 = vmatpush1.bf16.xpose.msra.mxu0 0
        %422 = vmatprep.subr.bf16.mxu0 0
        %423 = vmatpush1.bf16.xpose.msra.mxu0 0
        %424 = vmatprep.subr.bf16.mxu0 0
        %425 = vmatpush1.bf16.xpose.msra.mxu0 0
        %426 = vmatprep.subr.bf16.mxu0 0
        %427 = vmatpush1.bf16.xpose.msra.mxu0 0
        %428 = vmatprep.subr.bf16.mxu0 0
        %429 = vmatpush1.bf16.xpose.msra.mxu0 0
        %430 = vmatprep.subr.bf16.mxu0 0
        %431 = vmatpush1.bf16.xpose.msra.mxu0 0
        %432 = vmatprep.subr.bf16.mxu0 0
        %433 = vmatpush1.bf16.xpose.msra.mxu0 0
        %434 = vmatprep.subr.bf16.mxu0 0
        %435 = vmatpush1.bf16.xpose.msra.mxu0 0
        %436 = vmatprep.subr.bf16.mxu0 0
        %437 = vmatpush1.bf16.xpose.msra.mxu0 0
        %438 = vmatprep.subr.bf16.mxu0 0
        %439 = vmatpush1.bf16.xpose.msra.mxu0 0
        %440 = vmatprep.subr.bf16.mxu0 0
        %441 = vmatpush1.bf16.xpose.msra.mxu0 0
        %442 = vmatprep.mubr.bf16.mxu0 0
        %443 = vmatmul.mubr.bf16.gmra.mrb[0].mxu0 %v405
        %v444 = vpop.f32.mrb[0].mxu0
        %v445 = vadd.f32 %v399, %v444
        %v446 = vpop.f32.mrb[0].mxu0
        %v447 = vpop.f32.mrb[0].mxu0
        %v448 = vadd.f32 %v400, %v447
        %v449 = vpop.f32.mrb[0].mxu0
        %450 = vdwg.mxu0
        %451 = vrot.lane.b32.xlu0 %v394, 96
        %v452 = vpop.permute.xlu0 %451
        %v454 = vsel %vm403, %v394, 0
        %v457 = vsel %vm403, %v452, 0
        %459 = vmatprep.subr.bf16.mxu0 0
        %460 = vmatpush1.bf16.xpose.msra.mxu0 %v457
        %461 = vmatprep.subr.bf16.mxu0 0
        %462 = vmatpush1.bf16.xpose.msra.mxu0 0
        %463 = vmatprep.subr.bf16.mxu0 0
        %464 = vmatpush1.bf16.xpose.msra.mxu0 0
        %465 = vmatprep.subr.bf16.mxu0 0
        %466 = vmatpush1.bf16.xpose.msra.mxu0 0
        %467 = vmatprep.subr.bf16.mxu0 0
        %468 = vmatpush1.bf16.xpose.msra.mxu0 0
        %469 = vmatprep.subr.bf16.mxu0 0
        %470 = vmatpush1.bf16.xpose.msra.mxu0 0
        %471 = vmatprep.subr.bf16.mxu0 0
        %472 = vmatpush1.bf16.xpose.msra.mxu0 0
        %473 = vmatprep.subr.bf16.mxu0 0
        %474 = vmatpush1.bf16.xpose.msra.mxu0 0
        %475 = vmatprep.subr.bf16.mxu0 0
        %476 = vmatpush1.bf16.xpose.msra.mxu0 0
        %477 = vmatprep.subr.bf16.mxu0 0
        %478 = vmatpush1.bf16.xpose.msra.mxu0 0
        %479 = vmatprep.subr.bf16.mxu0 0
        %480 = vmatpush1.bf16.xpose.msra.mxu0 0
        %481 = vmatprep.subr.bf16.mxu0 0
        %482 = vmatpush1.bf16.xpose.msra.mxu0 0
        %483 = vmatprep.subr.bf16.mxu0 0
        %484 = vmatpush1.bf16.xpose.msra.mxu0 0
        %485 = vmatprep.subr.bf16.mxu0 0
        %486 = vmatpush1.bf16.xpose.msra.mxu0 0
        %487 = vmatprep.subr.bf16.mxu0 0
        %488 = vmatpush1.bf16.xpose.msra.mxu0 0
        %489 = vmatprep.subr.bf16.mxu0 0
        %490 = vmatpush1.bf16.xpose.msra.mxu0 0
        %491 = vmatprep.mubr.bf16.mxu0 0
        %492 = vmatmul.mubr.bf16.gmra.mrb[0].mxu0 %v454
        %v493 = vpop.f32.mrb[0].mxu0
        %v494 = vadd.f32 %v399, %v493
        %v495 = vpop.f32.mrb[0].mxu0
        %v496 = vpop.f32.mrb[0].mxu0
        %v497 = vadd.f32 %v400, %v496
        %v498 = vpop.f32.mrb[0].mxu0
        %499 = vdwg.mxu0
        %500 = vrot.lane.b32.xlu0 %v396, 96
        %v501 = vpop.permute.xlu0 %500
        %v503 = vsel %vm403, %v396, 0
        %v506 = vsel %vm403, %v501, 0
        %508 = vmatprep.subr.bf16.mxu0 0
        %509 = vmatpush1.bf16.xpose.msra.mxu0 %v506
        %510 = vmatprep.subr.bf16.mxu0 0
        %511 = vmatpush1.bf16.xpose.msra.mxu0 0
        %512 = vmatprep.subr.bf16.mxu0 0
        %513 = vmatpush1.bf16.xpose.msra.mxu0 0
        %514 = vmatprep.subr.bf16.mxu0 0
        %515 = vmatpush1.bf16.xpose.msra.mxu0 0
        %516 = vmatprep.subr.bf16.mxu0 0
        %517 = vmatpush1.bf16.xpose.msra.mxu0 0
        %518 = vmatprep.subr.bf16.mxu0 0
        %519 = vmatpush1.bf16.xpose.msra.mxu0 0
        %520 = vmatprep.subr.bf16.mxu0 0
        %521 = vmatpush1.bf16.xpose.msra.mxu0 0
        %522 = vmatprep.subr.bf16.mxu0 0
        %523 = vmatpush1.bf16.xpose.msra.mxu0 0
        %524 = vmatprep.subr.bf16.mxu0 0
        %525 = vmatpush1.bf16.xpose.msra.mxu0 0
        %526 = vmatprep.subr.bf16.mxu0 0
        %527 = vmatpush1.bf16.xpose.msra.mxu0 0
        %528 = vmatprep.subr.bf16.mxu0 0
        %529 = vmatpush1.bf16.xpose.msra.mxu0 0
        %530 = vmatprep.subr.bf16.mxu0 0
        %531 = vmatpush1.bf16.xpose.msra.mxu0 0
        %532 = vmatprep.subr.bf16.mxu0 0
        %533 = vmatpush1.bf16.xpose.msra.mxu0 0
        %534 = vmatprep.subr.bf16.mxu0 0
        %535 = vmatpush1.bf16.xpose.msra.mxu0 0
        %536 = vmatprep.subr.bf16.mxu0 0
        %537 = vmatpush1.bf16.xpose.msra.mxu0 0
        %538 = vmatprep.subr.bf16.mxu0 0
        %539 = vmatpush1.bf16.xpose.msra.mxu0 0
        %540 = vmatprep.mubr.bf16.mxu0 0
        %541 = vmatmul.mubr.bf16.gmra.mrb[0].mxu0 %v503
        %v542 = vpop.f32.mrb[0].mxu0
        %v543 = vadd.f32 %v399, %v542
        %v544 = vpop.f32.mrb[0].mxu0
        %v545 = vpop.f32.mrb[0].mxu0
        %v546 = vadd.f32 %v400, %v545
        %v547 = vpop.f32.mrb[0].mxu0
        %548 = vdwg.mxu0
        %549 = vrot.lane.b32.xlu0 %v398, 96
        %v550 = vpop.permute.xlu0 %549
        %v552 = vsel %vm403, %v398, 0
        %v555 = vsel %vm403, %v550, 0
        %557 = vmatprep.subr.bf16.mxu0 0
        %558 = vmatpush1.bf16.xpose.msra.mxu0 %v555
        %559 = vmatprep.subr.bf16.mxu0 0
        %560 = vmatpush1.bf16.xpose.msra.mxu0 0
        %561 = vmatprep.subr.bf16.mxu0 0
        %562 = vmatpush1.bf16.xpose.msra.mxu0 0
        %563 = vmatprep.subr.bf16.mxu0 0
        %564 = vmatpush1.bf16.xpose.msra.mxu0 0
        %565 = vmatprep.subr.bf16.mxu0 0
        %566 = vmatpush1.bf16.xpose.msra.mxu0 0
        %567 = vmatprep.subr.bf16.mxu0 0
        %568 = vmatpush1.bf16.xpose.msra.mxu0 0
        %569 = vmatprep.subr.bf16.mxu0 0
        %570 = vmatpush1.bf16.xpose.msra.mxu0 0
        %571 = vmatprep.subr.bf16.mxu0 0
        %572 = vmatpush1.bf16.xpose.msra.mxu0 0
        %573 = vmatprep.subr.bf16.mxu0 0
        %574 = vmatpush1.bf16.xpose.msra.mxu0 0
        %575 = vmatprep.subr.bf16.mxu0 0
        %576 = vmatpush1.bf16.xpose.msra.mxu0 0
        %577 = vmatprep.subr.bf16.mxu0 0
        %578 = vmatpush1.bf16.xpose.msra.mxu0 0
        %579 = vmatprep.subr.bf16.mxu0 0
        %580 = vmatpush1.bf16.xpose.msra.mxu0 0
        %581 = vmatprep.subr.bf16.mxu0 0
        %582 = vmatpush1.bf16.xpose.msra.mxu0 0
        %583 = vmatprep.subr.bf16.mxu0 0
        %584 = vmatpush1.bf16.xpose.msra.mxu0 0
        %585 = vmatprep.subr.bf16.mxu0 0
        %586 = vmatpush1.bf16.xpose.msra.mxu0 0
        %587 = vmatprep.subr.bf16.mxu0 0
        %588 = vmatpush1.bf16.xpose.msra.mxu0 0
        %589 = vmatprep.mubr.bf16.mxu0 0
        %590 = vmatmul.mubr.bf16.gmra.mrb[0].mxu0 %v552
        %v591 = vpop.f32.mrb[0].mxu0
        %v592 = vadd.f32 %v399, %v591
        %v593 = vpop.f32.mrb[0].mxu0
        %v594 = vpop.f32.mrb[0].mxu0
        %v595 = vadd.f32 %v400, %v594
        %v596 = vpop.f32.mrb[0].mxu0
        %597 = vdwg.mxu0
        %vm598 = vcmask 130048
        %v599 = vsel %vm598, %v445, -inf
        %600 = vmax.xlane.f32.xlu0 %v599
        %v601 = vpop.xlane.xlu0 %600
        %v602 = vsel %vm598, %v448, -inf
        %603 = vmax.xlane.f32.xlu0 %v602
        %v604 = vpop.xlane.xlu0 %603
        %v605 = vsel %vm598, %v494, -inf
        %606 = vmax.xlane.f32.xlu0 %v605
        %v607 = vpop.xlane.xlu0 %606
        %v608 = vsel %vm598, %v497, -inf
        %609 = vmax.xlane.f32.xlu0 %v608
        %v610 = vpop.xlane.xlu0 %609
        %v611 = vsel %vm598, %v543, -inf
        %612 = vmax.xlane.f32.xlu0 %v611
        %v613 = vpop.xlane.xlu0 %612
        %v614 = vsel %vm598, %v546, -inf
        %615 = vmax.xlane.f32.xlu0 %v614
        %v616 = vpop.xlane.xlu0 %615
        %v617 = vsel %vm598, %v592, -inf
        %618 = vmax.xlane.f32.xlu0 %v617
        %v619 = vpop.xlane.xlu0 %618
        %v620 = vsel %vm598, %v595, -inf
        %621 = vmax.xlane.f32.xlu0 %v620
        %v622 = vpop.xlane.xlu0 %621
        %v623 = vsub.f32 %v445, %v601
        %v624 = vsub.f32 %v448, %v604
        %v625 = vsub.f32 %v494, %v607
        %v626 = vsub.f32 %v497, %v610
        %v627 = vsub.f32 %v543, %v613
        %v628 = vsub.f32 %v546, %v616
        %v629 = vsub.f32 %v592, %v619
        %v630 = vsub.f32 %v595, %v622
        %v631 = vmul.f32 %v623, 1.442695
        %v632 = vpow.pop %v631
        %v633 = vmul.f32 %v624, 1.442695
        %v634 = vpow.pop %v633
        %v635 = vmul.f32 %v625, 1.442695
        %v636 = vpow.pop %v635
        %v637 = vmul.f32 %v626, 1.442695
        %v638 = vpow.pop %v637
        %v639 = vmul.f32 %v627, 1.442695
        %v640 = vpow.pop %v639
        %v641 = vmul.f32 %v628, 1.442695
        %v642 = vpow.pop %v641
        %v643 = vmul.f32 %v629, 1.442695
        %v644 = vpow.pop %v643
        %v645 = vmul.f32 %v630, 1.442695
        %v646 = vpow.pop %v645
        %v647 = vsel %vm598, %v632, 0.0
        %648 = vadd.xlane.f32.xlu0 %v647
        %v649 = vpop.xlane.xlu0 %648
        %v650 = vsel %vm598, %v634, 0.0
        %651 = vadd.xlane.f32.xlu0 %v650
        %v652 = vpop.xlane.xlu0 %651
        %v653 = vsel %vm598, %v636, 0.0
        %654 = vadd.xlane.f32.xlu0 %v653
        %v655 = vpop.xlane.xlu0 %654
        %v656 = vsel %vm598, %v638, 0.0
        %657 = vadd.xlane.f32.xlu0 %v656
        %v658 = vpop.xlane.xlu0 %657
        %v659 = vsel %vm598, %v640, 0.0
        %660 = vadd.xlane.f32.xlu0 %v659
        %v661 = vpop.xlane.xlu0 %660
        %v662 = vsel %vm598, %v642, 0.0
        %663 = vadd.xlane.f32.xlu0 %v662
        %v664 = vpop.xlane.xlu0 %663
        %v665 = vsel %vm598, %v644, 0.0
        %666 = vadd.xlane.f32.xlu0 %v665
        %v667 = vpop.xlane.xlu0 %666
        %v668 = vsel %vm598, %v646, 0.0
        %669 = vadd.xlane.f32.xlu0 %v668
        %v670 = vpop.xlane.xlu0 %669
        %v671 = vrcp.pop %v649
        %v672 = vrcp.pop %v652
        %v673 = vrcp.pop %v655
        %v674 = vrcp.pop %v658
        %v675 = vrcp.pop %v661
        %v676 = vrcp.pop %v664
        %v677 = vrcp.pop %v667
        %v678 = vrcp.pop %v670
        %v679 = vmul.f32 %v632, %v671
        %v680 = vmul.f32 %v634, %v672
        %v681 = vmul.f32 %v636, %v673
        %v682 = vmul.f32 %v638, %v674
        %v683 = vmul.f32 %v640, %v675
        %v684 = vmul.f32 %v642, %v676
        %v685 = vmul.f32 %v644, %v677
        %v686 = vmul.f32 %v646, %v678
        %v687 = vpack.c.bf16 %v680, %v679
        %v688 = vpack.c.bf16 %v682, %v681
        %v689 = vpack.c.bf16 %v684, %v683
        %v690 = vpack.c.bf16 %v686, %v685
        %691 = vrot.lane.b32.xlu0 %v391, 64
        %v692 = vpop.permute.xlu0 %691
        %v695 = vsel %vm598, %v687, 0
        %697 = vmatprep.subr.bf16.mxu0 0
        %698 = vmatpush1.bf16.msra.mxu0 %v692
        %699 = vmatprep.subr.bf16.mxu0 0
        %700 = vmatpush1.bf16.msra.mxu0 0
        %701 = vmatprep.subr.bf16.mxu0 0
        %702 = vmatpush1.bf16.msra.mxu0 0
        %703 = vmatprep.subr.bf16.mxu0 0
        %704 = vmatpush1.bf16.msra.mxu0 0
        %705 = vmatprep.subr.bf16.mxu0 0
        %706 = vmatpush1.bf16.msra.mxu0 0
        %707 = vmatprep.subr.bf16.mxu0 0
        %708 = vmatpush1.bf16.msra.mxu0 0
        %709 = vmatprep.subr.bf16.mxu0 0
        %710 = vmatpush1.bf16.msra.mxu0 0
        %711 = vmatprep.subr.bf16.mxu0 0
        %712 = vmatpush1.bf16.msra.mxu0 0
        %713 = vmatprep.subr.bf16.mxu0 0
        %714 = vmatpush1.bf16.msra.mxu0 0
        %715 = vmatprep.subr.bf16.mxu0 0
        %716 = vmatpush1.bf16.msra.mxu0 0
        %717 = vmatprep.subr.bf16.mxu0 0
        %718 = vmatpush1.bf16.msra.mxu0 0
        %719 = vmatprep.subr.bf16.mxu0 0
        %720 = vmatpush1.bf16.msra.mxu0 0
        %721 = vmatprep.subr.bf16.mxu0 0
        %722 = vmatpush1.bf16.msra.mxu0 0
        %723 = vmatprep.subr.bf16.mxu0 0
        %724 = vmatpush1.bf16.msra.mxu0 0
        %725 = vmatprep.subr.bf16.mxu0 0
        %726 = vmatpush1.bf16.msra.mxu0 0
        %727 = vmatprep.subr.bf16.mxu0 0
        %728 = vmatpush1.bf16.msra.mxu0 0
        %729 = vmatprep.mubr.bf16.mxu0 0
        %730 = vmatmul.mubr.bf16.gmra.mrb[0].mxu0 %v695
        %v731 = vpop.f32.mrb[0].mxu0
        %v732 = vadd.f32 0.0, %v731
        %v733 = vpop.f32.mrb[0].mxu0
        %v734 = vpop.f32.mrb[0].mxu0
        %v735 = vadd.f32 0.0, %v734
        %v736 = vpop.f32.mrb[0].mxu0
        %737 = vdwg.mxu0
        %738 = vrot.lane.b32.xlu0 %v394, 64
        %v739 = vpop.permute.xlu0 %738
        %v742 = vsel %vm598, %v688, 0
        %744 = vmatprep.subr.bf16.mxu0 0
        %745 = vmatpush1.bf16.msra.mxu0 %v739
        %746 = vmatprep.subr.bf16.mxu0 0
        %747 = vmatpush1.bf16.msra.mxu0 0
        %748 = vmatprep.subr.bf16.mxu0 0
        %749 = vmatpush1.bf16.msra.mxu0 0
        %750 = vmatprep.subr.bf16.mxu0 0
        %751 = vmatpush1.bf16.msra.mxu0 0
        %752 = vmatprep.subr.bf16.mxu0 0
        %753 = vmatpush1.bf16.msra.mxu0 0
        %754 = vmatprep.subr.bf16.mxu0 0
        %755 = vmatpush1.bf16.msra.mxu0 0
        %756 = vmatprep.subr.bf16.mxu0 0
        %757 = vmatpush1.bf16.msra.mxu0 0
        %758 = vmatprep.subr.bf16.mxu0 0
        %759 = vmatpush1.bf16.msra.mxu0 0
        %760 = vmatprep.subr.bf16.mxu0 0
        %761 = vmatpush1.bf16.msra.mxu0 0
        %762 = vmatprep.subr.bf16.mxu0 0
        %763 = vmatpush1.bf16.msra.mxu0 0
        %764 = vmatprep.subr.bf16.mxu0 0
        %765 = vmatpush1.bf16.msra.mxu0 0
        %766 = vmatprep.subr.bf16.mxu0 0
        %767 = vmatpush1.bf16.msra.mxu0 0
        %768 = vmatprep.subr.bf16.mxu0 0
        %769 = vmatpush1.bf16.msra.mxu0 0
        %770 = vmatprep.subr.bf16.mxu0 0
        %771 = vmatpush1.bf16.msra.mxu0 0
        %772 = vmatprep.subr.bf16.mxu0 0
        %773 = vmatpush1.bf16.msra.mxu0 0
        %774 = vmatprep.subr.bf16.mxu0 0
        %775 = vmatpush1.bf16.msra.mxu0 0
        %776 = vmatprep.mubr.bf16.mxu0 0
        %777 = vmatmul.mubr.bf16.gmra.mrb[0].mxu0 %v742
        %v778 = vpop.f32.mrb[0].mxu0
        %v779 = vadd.f32 0.0, %v778
        %v780 = vpop.f32.mrb[0].mxu0
        %v781 = vpop.f32.mrb[0].mxu0
        %v782 = vadd.f32 0.0, %v781
        %v783 = vpop.f32.mrb[0].mxu0
        %784 = vdwg.mxu0
        %785 = vrot.lane.b32.xlu0 %v396, 64
        %v786 = vpop.permute.xlu0 %785
        %v789 = vsel %vm598, %v689, 0
        %791 = vmatprep.subr.bf16.mxu0 0
        %792 = vmatpush1.bf16.msra.mxu0 %v786
        %793 = vmatprep.subr.bf16.mxu0 0
        %794 = vmatpush1.bf16.msra.mxu0 0
        %795 = vmatprep.subr.bf16.mxu0 0
        %796 = vmatpush1.bf16.msra.mxu0 0
        %797 = vmatprep.subr.bf16.mxu0 0
        %798 = vmatpush1.bf16.msra.mxu0 0
        %799 = vmatprep.subr.bf16.mxu0 0
        %800 = vmatpush1.bf16.msra.mxu0 0
        %801 = vmatprep.subr.bf16.mxu0 0
        %802 = vmatpush1.bf16.msra.mxu0 0
        %803 = vmatprep.subr.bf16.mxu0 0
        %804 = vmatpush1.bf16.msra.mxu0 0
        %805 = vmatprep.subr.bf16.mxu0 0
        %806 = vmatpush1.bf16.msra.mxu0 0
        %807 = vmatprep.subr.bf16.mxu0 0
        %808 = vmatpush1.bf16.msra.mxu0 0
        %809 = vmatprep.subr.bf16.mxu0 0
        %810 = vmatpush1.bf16.msra.mxu0 0
        %811 = vmatprep.subr.bf16.mxu0 0
        %812 = vmatpush1.bf16.msra.mxu0 0
        %813 = vmatprep.subr.bf16.mxu0 0
        %814 = vmatpush1.bf16.msra.mxu0 0
        %815 = vmatprep.subr.bf16.mxu0 0
        %816 = vmatpush1.bf16.msra.mxu0 0
        %817 = vmatprep.subr.bf16.mxu0 0
        %818 = vmatpush1.bf16.msra.mxu0 0
        %819 = vmatprep.subr.bf16.mxu0 0
        %820 = vmatpush1.bf16.msra.mxu0 0
        %821 = vmatprep.subr.bf16.mxu0 0
        %822 = vmatpush1.bf16.msra.mxu0 0
        %823 = vmatprep.mubr.bf16.mxu0 0
        %824 = vmatmul.mubr.bf16.gmra.mrb[0].mxu0 %v789
        %v825 = vpop.f32.mrb[0].mxu0
        %v826 = vadd.f32 0.0, %v825
        %v827 = vpop.f32.mrb[0].mxu0
        %v828 = vpop.f32.mrb[0].mxu0
        %v829 = vadd.f32 0.0, %v828
        %v830 = vpop.f32.mrb[0].mxu0
        %831 = vdwg.mxu0
        %832 = vrot.lane.b32.xlu0 %v398, 64
        %v833 = vpop.permute.xlu0 %832
        %v836 = vsel %vm598, %v690, 0
        %838 = vmatprep.subr.bf16.mxu0 0
        %839 = vmatpush1.bf16.msra.mxu0 %v833
        %840 = vmatprep.subr.bf16.mxu0 0
        %841 = vmatpush1.bf16.msra.mxu0 0
        %842 = vmatprep.subr.bf16.mxu0 0
        %843 = vmatpush1.bf16.msra.mxu0 0
        %844 = vmatprep.subr.bf16.mxu0 0
        %845 = vmatpush1.bf16.msra.mxu0 0
        %846 = vmatprep.subr.bf16.mxu0 0
        %847 = vmatpush1.bf16.msra.mxu0 0
        %848 = vmatprep.subr.bf16.mxu0 0
        %849 = vmatpush1.bf16.msra.mxu0 0
        %850 = vmatprep.subr.bf16.mxu0 0
        %851 = vmatpush1.bf16.msra.mxu0 0
        %852 = vmatprep.subr.bf16.mxu0 0
        %853 = vmatpush1.bf16.msra.mxu0 0
        %854 = vmatprep.subr.bf16.mxu0 0
        %855 = vmatpush1.bf16.msra.mxu0 0
        %856 = vmatprep.subr.bf16.mxu0 0
        %857 = vmatpush1.bf16.msra.mxu0 0
        %858 = vmatprep.subr.bf16.mxu0 0
        %859 = vmatpush1.bf16.msra.mxu0 0
        %860 = vmatprep.subr.bf16.mxu0 0
        %861 = vmatpush1.bf16.msra.mxu0 0
        %862 = vmatprep.subr.bf16.mxu0 0
        %863 = vmatpush1.bf16.msra.mxu0 0
        %864 = vmatprep.subr.bf16.mxu0 0
        %865 = vmatpush1.bf16.msra.mxu0 0
        %866 = vmatprep.subr.bf16.mxu0 0
        %867 = vmatpush1.bf16.msra.mxu0 0
        %868 = vmatprep.subr.bf16.mxu0 0
        %869 = vmatpush1.bf16.msra.mxu0 0
        %870 = vmatprep.mubr.bf16.mxu0 0
        %871 = vmatmul.mubr.bf16.gmra.mrb[0].mxu0 %v836
        %v872 = vpop.f32.mrb[0].mxu0
        %v873 = vadd.f32 0.0, %v872
        %v874 = vpop.f32.mrb[0].mxu0
        %v875 = vpop.f32.mrb[0].mxu0
        %v876 = vadd.f32 0.0, %v875
        %v877 = vpop.f32.mrb[0].mxu0
        %878 = vdwg.mxu0
        %881 = vrot.lane.b32.xlu0 %v779, 8
        %v882 = vpop.permute.xlu0 %881
        %883 = vrot.lane.b32.xlu0 %v782, 8
        %v884 = vpop.permute.xlu0 %883
        %889 = vrot.lane.b32.xlu0 %v826, 16
        %v890 = vpop.permute.xlu0 %889
        %891 = vrot.lane.b32.xlu0 %v829, 16
        %v892 = vpop.permute.xlu0 %891
        %897 = vrot.lane.b32.xlu0 %v873, 24
        %v898 = vpop.permute.xlu0 %897
        %899 = vrot.lane.b32.xlu0 %v876, 24
        %v900 = vpop.permute.xlu0 %899
        %v903 = vsel %vm403, %v732, %v882
        %v904 = vsel %vm403, %v735, %v884
        %v905 = vsel %vm598, %v903, %v890
        %v906 = vsel %vm598, %v904, %v892
        %vm907 = vcmask 195584
        %v908 = vsel %vm907, %v905, %v898
        %v909 = vsel %vm907, %v906, %v900
        %v910 = vpack.c.bf16 %v909, %v908
        %v911 = vlaneseq
        %v912 = vshrl.u32 %v911, 7
        %v913 = vsub.s32 1, %v912
        %v914 = vrot.slane %v328, %v913
        %v915 = vunpack.c.h.b16 %v320
        %v916 = vunpack.c.h.b16 %v322
        %v917 = vunpack.c.h.b16 %v324
        %v918 = vunpack.c.h.b16 %v326
        %v919 = vpack.c.b16 %v916, %v915
        %v920 = vpack.c.b16 %v918, %v917
        %v924 = vsel %vm346, %v910, 0
        %926 = vmatprep.subr.bf16.mxu0 0
        %927 = vmatpush1.bf16.msra.mxu0 %v919
        %928 = vmatprep.subr.bf16.mxu0 0
        %929 = vmatpush1.bf16.msra.mxu0 %v920
        %930 = vmatprep.subr.bf16.mxu0 0
        %931 = vmatpush1.bf16.msra.mxu0 0
        %932 = vmatprep.subr.bf16.mxu0 0
        %933 = vmatpush1.bf16.msra.mxu0 0
        %934 = vmatprep.subr.bf16.mxu0 0
        %935 = vmatpush1.bf16.msra.mxu0 0
        %936 = vmatprep.subr.bf16.mxu0 0
        %937 = vmatpush1.bf16.msra.mxu0 0
        %938 = vmatprep.subr.bf16.mxu0 0
        %939 = vmatpush1.bf16.msra.mxu0 0
        %940 = vmatprep.subr.bf16.mxu0 0
        %941 = vmatpush1.bf16.msra.mxu0 0
        %942 = vmatprep.subr.bf16.mxu0 0
        %943 = vmatpush1.bf16.msra.mxu0 0
        %944 = vmatprep.subr.bf16.mxu0 0
        %945 = vmatpush1.bf16.msra.mxu0 0
        %946 = vmatprep.subr.bf16.mxu0 0
        %947 = vmatpush1.bf16.msra.mxu0 0
        %948 = vmatprep.subr.bf16.mxu0 0
        %949 = vmatpush1.bf16.msra.mxu0 0
        %950 = vmatprep.subr.bf16.mxu0 0
        %951 = vmatpush1.bf16.msra.mxu0 0
        %952 = vmatprep.subr.bf16.mxu0 0
        %953 = vmatpush1.bf16.msra.mxu0 0
        %954 = vmatprep.subr.bf16.mxu0 0
        %955 = vmatpush1.bf16.msra.mxu0 0
        %956 = vmatprep.subr.bf16.mxu0 0
        %957 = vmatpush1.bf16.msra.mxu0 0
        %958 = vmatprep.mubr.bf16.mxu0 0
        %959 = vmatmul.mubr.bf16.gmra.mrb[0].mxu0 %v924
        %v960 = vpop.f32.mrb[0].mxu0
        %v961 = vadd.f32 %v914, %v960
        %v962 = vpop.f32.mrb[0].mxu0
        %v963 = vpop.f32.mrb[0].mxu0
        %v964 = vadd.f32 %v914, %v963
        %v965 = vpop.f32.mrb[0].mxu0
        %966 = vdwg.mxu0
        %v967 = vadd.f32 %v318, %v961
        %v968 = vadd.f32 %v319, %v964
        %v969 = vsel %vm346, %v967, 0.0
        %970 = vadd.xlane.f32.xlu0 %v969
        %v971 = vpop.xlane.xlu0 %970
        %v972 = vsel %vm346, %v968, 0.0
        %973 = vadd.xlane.f32.xlu0 %v972
        %v974 = vpop.xlane.xlu0 %973
        %v975 = vrcp.pop 32.0
        %v976 = vmul.f32 %v971, %v975
        %v977 = vmul.f32 %v974, %v975
        %v978 = vsub.f32 %v967, %v976
        %v979 = vsub.f32 %v968, %v977
        %v980 = vmul.f32 %v978, %v978
        %v981 = vmul.f32 %v979, %v979
        %v982 = vsel %vm346, %v980, 0.0
        %983 = vadd.xlane.f32.xlu0 %v982
        %v984 = vpop.xlane.xlu0 %983
        %v985 = vsel %vm346, %v981, 0.0
        %986 = vadd.xlane.f32.xlu0 %v985
        %v987 = vpop.xlane.xlu0 %986
        %v988 = vmul.f32 %v984, %v975
        %v989 = vmul.f32 %v987, %v975
        %v990 = vadd.f32 %v988, 1e-12
        %v991 = vadd.f32 %v989, 1e-12
        %v992 = vrsqrt.pop %v990
        %v993 = vrsqrt.pop %v991
        %v994 = vmul.f32 %v978, %v992
        %v995 = vmul.f32 %v979, %v993
        %v996 = vlaneseq
        %v997 = vshrl.u32 %v996, 7
        %v998 = vsub.s32 4, %v997
        %v999 = vrot.slane %v328, %v998
        %v1000 = vmul.f32 %v994, %v999
        %v1001 = vmul.f32 %v995, %v999
        %v1002 = vlaneseq
        %v1003 = vshrl.u32 %v1002, 7
        %v1004 = vsub.s32 5, %v1003
        %v1005 = vrot.slane %v328, %v1004
        %v1006 = vadd.f32 %v1000, %v1005
        %v1007 = vadd.f32 %v1001, %v1005
        %v1008 = vpack.c.bf16 %v1007, %v1006
        %v1009 = vlaneseq
        %v1010 = vshrl.u32 %v1009, 7
        %v1011 = vsub.s32 2, %v1010
        %v1012 = vrot.slane %v328, %v1011
        %1013 = vrot.lane.b32.xlu0 %v919, 96
        %v1014 = vpop.permute.xlu0 %1013
        %1015 = vrot.lane.b32.xlu0 %v920, 96
        %v1016 = vpop.permute.xlu0 %1015
        %v1020 = vsel %vm346, %v1008, 0
        %1022 = vmatprep.subr.bf16.mxu0 0
        %1023 = vmatpush1.bf16.msra.mxu0 %v1014
        %1024 = vmatprep.subr.bf16.mxu0 0
        %1025 = vmatpush1.bf16.msra.mxu0 %v1016
        %1026 = vmatprep.subr.bf16.mxu0 0
        %1027 = vmatpush1.bf16.msra.mxu0 0
        %1028 = vmatprep.subr.bf16.mxu0 0
        %1029 = vmatpush1.bf16.msra.mxu0 0
        %1030 = vmatprep.subr.bf16.mxu0 0
        %1031 = vmatpush1.bf16.msra.mxu0 0
        %1032 = vmatprep.subr.bf16.mxu0 0
        %1033 = vmatpush1.bf16.msra.mxu0 0
        %1034 = vmatprep.subr.bf16.mxu0 0
        %1035 = vmatpush1.bf16.msra.mxu0 0
        %1036 = vmatprep.subr.bf16.mxu0 0
        %1037 = vmatpush1.bf16.msra.mxu0 0
        %1038 = vmatprep.subr.bf16.mxu0 0
        %1039 = vmatpush1.bf16.msra.mxu0 0
        %1040 = vmatprep.subr.bf16.mxu0 0
        %1041 = vmatpush1.bf16.msra.mxu0 0
        %1042 = vmatprep.subr.bf16.mxu0 0
        %1043 = vmatpush1.bf16.msra.mxu0 0
        %1044 = vmatprep.subr.bf16.mxu0 0
        %1045 = vmatpush1.bf16.msra.mxu0 0
        %1046 = vmatprep.subr.bf16.mxu0 0
        %1047 = vmatpush1.bf16.msra.mxu0 0
        %1048 = vmatprep.subr.bf16.mxu0 0
        %1049 = vmatpush1.bf16.msra.mxu0 0
        %1050 = vmatprep.subr.bf16.mxu0 0
        %1051 = vmatpush1.bf16.msra.mxu0 0
        %1052 = vmatprep.subr.bf16.mxu0 0
        %1053 = vmatpush1.bf16.msra.mxu0 0
        %1054 = vmatprep.mubr.bf16.mxu0 0
        %1055 = vmatmul.mubr.bf16.gmra.mrb[0].mxu0 %v1020
        %v1056 = vpop.f32.mrb[0].mxu0
        %v1057 = vadd.f32 %v1012, %v1056
        %v1058 = vpop.f32.mrb[0].mxu0
        %v1059 = vpop.f32.mrb[0].mxu0
        %v1060 = vadd.f32 %v1012, %v1059
        %v1061 = vpop.f32.mrb[0].mxu0
        %1062 = vdwg.mxu0
        %v1063 = vmul.f32 %v1057, 0.5
        %v1064 = vmul.f32 %v1060, 0.5
        %v1065 = vmul.f32 %v1057, 0.044715
        %v1066 = vmul.f32 %v1060, 0.044715
        %v1067 = vmul.f32 %v1065, %v1057
        %v1068 = vmul.f32 %v1066, %v1060
        %v1069 = vmul.f32 %v1067, %v1057
        %v1070 = vmul.f32 %v1068, %v1060
        %v1071 = vadd.f32 %v1057, %v1069
        %v1072 = vadd.f32 %v1060, %v1070
        %v1073 = vmul.f32 %v1071, 0.7978846
        %v1074 = vmul.f32 %v1072, 0.7978846
        %v1075 = vtanh.pop %v1073
        %v1076 = vtanh.pop %v1074
        %v1077 = vadd.f32 %v1075, 1.0
        %v1078 = vadd.f32 %v1076, 1.0
        %v1079 = vmul.f32 %v1063, %v1077
        %v1080 = vmul.f32 %v1064, %v1078
        %v1081 = vpack.c.bf16 %v1080, %v1079
        %v1082 = vlaneseq
        %v1083 = vshrl.u32 %v1082, 7
        %v1084 = vsub.s32 3, %v1083
        %v1085 = vrot.slane %v328, %v1084
        %v1090 = vunpack.c.l.b16 %v321
        %v1091 = vunpack.c.l.b16 %v323
        %v1092 = vunpack.c.l.b16 %v325
        %v1093 = vunpack.c.l.b16 %v327
        %v1094 = vpack.c.b16 %v1091, %v1090
        %v1095 = vpack.c.b16 %v1093, %v1092
        %1096 = vrot.lane.b32.xlu0 %v919, 32
        %v1097 = vpop.permute.xlu0 %1096
        %1098 = vrot.lane.b32.xlu0 %v1094, 32
        %v1099 = vpop.permute.xlu0 %1098
        %1100 = vrot.lane.b32.xlu0 %v920, 32
        %v1101 = vpop.permute.xlu0 %1100
        %1102 = vrot.lane.b32.xlu0 %v1095, 32
        %v1103 = vpop.permute.xlu0 %1102
        %vm1104 = vcmask 261120
        %v1105 = vsel %vm1104, %v1097, %v1099
        %v1106 = vsel %vm1104, %v1101, %v1103
        %vm1107 = vcmask 523264
        %v1109 = vsel %vm1107, %v1081, 0
        %v1112 = vsel %vm1107, %v1105, 0
        %v1115 = vsel %vm1107, %v1106, 0
        %1117 = vmatprep.subr.bf16.mxu0 0
        %1118 = vmatpush1.bf16.xpose.msra.mxu0 %v1112
        %1119 = vmatprep.subr.bf16.mxu0 0
        %1120 = vmatpush1.bf16.xpose.msra.mxu0 %v1115
        %1121 = vmatprep.subr.bf16.mxu0 0
        %1122 = vmatpush1.bf16.xpose.msra.mxu0 0
        %1123 = vmatprep.subr.bf16.mxu0 0
        %1124 = vmatpush1.bf16.xpose.msra.mxu0 0
        %1125 = vmatprep.subr.bf16.mxu0 0
        %1126 = vmatpush1.bf16.xpose.msra.mxu0 0
        %1127 = vmatprep.subr.bf16.mxu0 0
        %1128 = vmatpush1.bf16.xpose.msra.mxu0 0
        %1129 = vmatprep.subr.bf16.mxu0 0
        %1130 = vmatpush1.bf16.xpose.msra.mxu0 0
        %1131 = vmatprep.subr.bf16.mxu0 0
        %1132 = vmatpush1.bf16.xpose.msra.mxu0 0
        %1133 = vmatprep.subr.bf16.mxu0 0
        %1134 = vmatpush1.bf16.xpose.msra.mxu0 0
        %1135 = vmatprep.subr.bf16.mxu0 0
        %1136 = vmatpush1.bf16.xpose.msra.mxu0 0
        %1137 = vmatprep.subr.bf16.mxu0 0
        %1138 = vmatpush1.bf16.xpose.msra.mxu0 0
        %1139 = vmatprep.subr.bf16.mxu0 0
        %1140 = vmatpush1.bf16.xpose.msra.mxu0 0
        %1141 = vmatprep.subr.bf16.mxu0 0
        %1142 = vmatpush1.bf16.xpose.msra.mxu0 0
        %1143 = vmatprep.subr.bf16.mxu0 0
        %1144 = vmatpush1.bf16.xpose.msra.mxu0 0
        %1145 = vmatprep.subr.bf16.mxu0 0
        %1146 = vmatpush1.bf16.xpose.msra.mxu0 0
        %1147 = vmatprep.subr.bf16.mxu0 0
        %1148 = vmatpush1.bf16.xpose.msra.mxu0 0
        %1149 = vmatprep.mubr.bf16.mxu0 0
        %1150 = vmatmul.mubr.bf16.gmra.mrb[0].mxu0 %v1109
        %v1151 = vpop.f32.mrb[0].mxu0
        %v1152 = vadd.f32 %v1085, %v1151
        %v1153 = vpop.f32.mrb[0].mxu0
        %v1154 = vpop.f32.mrb[0].mxu0
        %v1155 = vadd.f32 %v1085, %v1154
        %v1156 = vpop.f32.mrb[0].mxu0
        %1157 = vdwg.mxu0
        %v1158 = vadd.f32 %v1006, %v1152
        %v1159 = vadd.f32 %v1007, %v1155
        %v1160 = vsel %vm346, %v1158, 0.0
        %1161 = vadd.xlane.f32.xlu0 %v1160
        %v1162 = vpop.xlane.xlu0 %1161
        %v1163 = vsel %vm346, %v1159, 0.0
        %1164 = vadd.xlane.f32.xlu0 %v1163
        %v1165 = vpop.xlane.xlu0 %1164
        %v1166 = vmul.f32 %v1162, %v975
        %v1167 = vmul.f32 %v1165, %v975
        %v1168 = vsub.f32 %v1158, %v1166
        %v1169 = vsub.f32 %v1159, %v1167
        %v1170 = vmul.f32 %v1168, %v1168
        %v1171 = vmul.f32 %v1169, %v1169
        %v1172 = vsel %vm346, %v1170, 0.0
        %1173 = vadd.xlane.f32.xlu0 %v1172
        %v1174 = vpop.xlane.xlu0 %1173
        %v1175 = vsel %vm346, %v1171, 0.0
        %1176 = vadd.xlane.f32.xlu0 %v1175
        %v1177 = vpop.xlane.xlu0 %1176
        %v1178 = vmul.f32 %v1174, %v975
        %v1179 = vmul.f32 %v1177, %v975
        %v1180 = vadd.f32 %v1178, 1e-12
        %v1181 = vadd.f32 %v1179, 1e-12
        %v1182 = vrsqrt.pop %v1180
        %v1183 = vrsqrt.pop %v1181
        %v1184 = vmul.f32 %v1168, %v1182
        %v1185 = vmul.f32 %v1169, %v1183
        %v1186 = vlaneseq
        %v1187 = vshrl.u32 %v1186, 7
        %v1188 = vsub.s32 6, %v1187
        %v1189 = vrot.slane %v328, %v1188
        %v1190 = vmul.f32 %v1184, %v1189
        %v1191 = vmul.f32 %v1185, %v1189
        %v1192 = vlaneseq
        %v1193 = vshrl.u32 %v1192, 7
        %v1194 = vsub.s32 7, %v1193
        %v1195 = vrot.slane %v328, %v1194
        %v1196 = vadd.f32 %v1190, %v1195
        %v1197 = vadd.f32 %v1191, %v1195
        %1198 = vst.msk [vmem:[#allocation2] sm:$0xff] %vm346, %v1196
        %1199 = vst.msk [vmem:[#allocation2 + $0x8] sm:$0xff] %vm346, %v1197
        %p1200 = scmp.eq.s32.totalorder %s22, 1
        // Predicated region
        $region53: #{bert_multilabel_forward.1} parent=47 // pred_check
          %p1201 = pneg %p1200
        $region54: #{bert_multilabel_forward.1} parent=47 // pred_check_branch
          %1203 = sbr.rel (%p1201) target = $region56
        $region55: #{bert_multilabel_forward.1} parent=47 // pred_region
          %v1204 = vld [vmem:[%s6] sm:$0x7]
          %v1205 = vld [vmem:[%s2] sm:$0x3]
          %v1207 = vsel %vm598, %v1205, 0
          %1209 = vmatprep.subr.mxu0 0.0
          %1210 = vmatpush1.msra.mxu0 %v1196
          %1211 = vmatprep.subr.mxu0 0.0
          %1212 = vmatpush1.msra.mxu0 %v1197
          %1213 = vmatprep.subr.mxu0 0.0
          %1214 = vmatpush1.msra.mxu0 0.0
          %1215 = vmatprep.subr.mxu0 0.0
          %1216 = vmatpush1.msra.mxu0 0.0
          %1217 = vmatprep.subr.mxu0 0.0
          %1218 = vmatpush1.msra.mxu0 0.0
          %1219 = vmatprep.subr.mxu0 0.0
          %1220 = vmatpush1.msra.mxu0 0.0
          %1221 = vmatprep.subr.mxu0 0.0
          %1222 = vmatpush1.msra.mxu0 0.0
          %1223 = vmatprep.subr.mxu0 0.0
          %1224 = vmatpush1.msra.mxu0 0.0
          %1225 = vmatprep.subr.mxu0 0.0
          %1226 = vmatpush1.msra.mxu0 0.0
          %1227 = vmatprep.subr.mxu0 0.0
          %1228 = vmatpush1.msra.mxu0 0.0
          %1229 = vmatprep.subr.mxu0 0.0
          %1230 = vmatpush1.msra.mxu0 0.0
          %1231 = vmatprep.subr.mxu0 0.0
          %1232 = vmatpush1.msra.mxu0 0.0
          %1233 = vmatprep.subr.mxu0 0.0
          %1234 = vmatpush1.msra.mxu0 0.0
          %1235 = vmatprep.subr.mxu0 0.0
          %1236 = vmatpush1.msra.mxu0 0.0
          %1237 = vmatprep.subr.mxu0 0.0
          %1238 = vmatpush1.msra.mxu0 0.0
          %1239 = vmatprep.subr.mxu0 0.0
          %1240 = vmatpush1.msra.mxu0 0.0
          %1241 = vmatprep.subr.mxu0 0.0
          %1242 = vmatpush1.msra.mxu0 0.0
          %1243 = vmatprep.subr.mxu0 0.0
          %1244 = vmatpush1.msra.mxu0 0.0
          %1245 = vmatprep.subr.mxu0 0.0
          %1246 = vmatpush1.msra.mxu0 0.0
          %1247 = vmatprep.subr.mxu0 0.0
          %1248 = vmatpush1.msra.mxu0 0.0
          %1249 = vmatprep.subr.mxu0 0.0
          %1250 = vmatpush1.msra.mxu0 0.0
          %1251 = vmatprep.subr.mxu0 0.0
          %1252 = vmatpush1.msra.mxu0 0.0
          %1253 = vmatprep.subr.mxu0 0.0
          %1254 = vmatpush1.msra.mxu0 0.0
          %1255 = vmatprep.subr.mxu0 0.0
          %1256 = vmatpush1.msra.mxu0 0.0
          %1257 = vmatprep.subr.mxu0 0.0
          %1258 = vmatpush1.msra.mxu0 0.0
          %1259 = vmatprep.subr.mxu0 0.0
          %1260 = vmatpush1.msra.mxu0 0.0
          %1261 = vmatprep.subr.mxu0 0.0
          %1262 = vmatpush1.msra.mxu0 0.0
          %1263 = vmatprep.subr.mxu0 0.0
          %1264 = vmatpush1.msra.mxu0 0.0
          %1265 = vmatprep.subr.mxu0 0.0
          %1266 = vmatpush1.msra.mxu0 0.0
          %1267 = vmatprep.subr.mxu0 0.0
          %1268 = vmatpush1.msra.mxu0 0.0
          %1269 = vmatprep.subr.mxu0 0.0
          %1270 = vmatpush1.msra.mxu0 0.0
          %1271 = vmatprep.subr.mxu0 0.0
          %1272 = vmatpush1.msra.mxu0 0.0
          %1273 = vmatprep.mubr.f32.mxu0 0.0
          %1274 = vmatmul.mubr.f32.gmra.mrb[0].mxu0 %v1207
          %v1275 = vpop.f32.mrb[0].mxu0
          %v1276 = vadd.f32 0.0, %v1275
          %v1277 = vpop.f32.mrb[0].mxu0
          %1278 = vdwg.mxu0
          %v1279 = vld [vmem:[%s5] sm:$0xff]
          %v1280 = vld [vmem:[%s5 + $0x8] sm:$0xff]
          %v1281 = vld [vmem:[%s5 + $0x10] sm:$0xff]
          %v1282 = vld [vmem:[%s5 + $0x18] sm:$0xff]
          %v1283 = vlaneseq
          %v1284 = vshrl.u32 %v1283, 7
          %v1285 = vsub.s32 0, %v1284
          %v1286 = vrot.slane %v1204, %v1285
          %v1288 = vsel %vm346, %v1276, 0
          %1290 = vmatprep.subr.mxu0 0.0
          %1291 = vmatpush1.msra.mxu0 %v1279
          %1292 = vmatprep.subr.mxu0 0.0
          %1293 = vmatpush1.msra.mxu0 %v1280
          %1294 = vmatprep.subr.mxu0 0.0
          %1295 = vmatpush1.msra.mxu0 %v1281
          %1296 = vmatprep.subr.mxu0 0.0
          %1297 = vmatpush1.msra.mxu0 %v1282
          %1298 = vmatprep.subr.mxu0 0.0
          %1299 = vmatpush1.msra.mxu0 0.0
          %1300 = vmatprep.subr.mxu0 0.0
          %1301 = vmatpush1.msra.mxu0 0.0
          %1302 = vmatprep.subr.mxu0 0.0
          %1303 = vmatpush1.msra.mxu0 0.0
          %1304 = vmatprep.subr.mxu0 0.0
          %1305 = vmatpush1.msra.mxu0 0.0
          %1306 = vmatprep.subr.mxu0 0.0
          %1307 = vmatpush1.msra.mxu0 0.0
          %1308 = vmatprep.subr.mxu0 0.0
          %1309 = vmatpush1.msra.mxu0 0.0
          %1310 = vmatprep.subr.mxu0 0.0
          %1311 = vmatpush1.msra.mxu0 0.0
          %1312 = vmatprep.subr.mxu0 0.0
          %1313 = vmatpush1.msra.mxu0 0.0
          %1314 = vmatprep.subr.mxu0 0.0
          %1315 = vmatpush1.msra.mxu0 0.0
          %1316 = vmatprep.subr.mxu0 0.0
          %1317 = vmatpush1.msra.mxu0 0.0
          %1318 = vmatprep.subr.mxu0 0.0
          %1319 = vmatpush1.msra.mxu0 0.0
          %1320 = vmatprep.subr.mxu0 0.0
          %1321 = vmatpush1.msra.mxu0 0.0
          %1322 = vmatprep.subr.mxu0 0.0
          %1323 = vmatpush1.msra.mxu0 0.0
          %1324 = vmatprep.subr.mxu0 0.0
          %1325 = vmatpush1.msra.mxu0 0.0
          %1326 = vmatprep.subr.mxu0 0.0
          %1327 = vmatpush1.msra.mxu0 0.0
          %1328 = vmatprep.subr.mxu0 0.0
          %1329 = vmatpush1.msra.mxu0 0.0
          %1330 = vmatprep.subr.mxu0 0.0
          %1331 = vmatpush1.msra.mxu0 0.0
          %1332 = vmatprep.subr.mxu0 0.0
          %1333 = vmatpush1.msra.mxu0 0.0
          %1334 = vmatprep.subr.mxu0 0.0
          %1335 = vmatpush1.msra.mxu0 0.0
          %1336 = vmatprep.subr.mxu0 0.0
          %1337 = vmatpush1.msra.mxu0 0.0
          %1338 = vmatprep.subr.mxu0 0.0
          %1339 = vmatpush1.msra.mxu0 0.0
          %1340 = vmatprep.subr.mxu0 0.0
          %1341 = vmatpush1.msra.mxu0 0.0
          %1342 = vmatprep.subr.mxu0 0.0
          %1343 = vmatpush1.msra.mxu0 0.0
          %1344 = vmatprep.subr.mxu0 0.0
          %1345 = vmatpush1.msra.mxu0 0.0
          %1346 = vmatprep.subr.mxu0 0.0
          %1347 = vmatpush1.msra.mxu0 0.0
          %1348 = vmatprep.subr.mxu0 0.0
          %1349 = vmatpush1.msra.mxu0 0.0
          %1350 = vmatprep.subr.mxu0 0.0
          %1351 = vmatpush1.msra.mxu0 0.0
          %1352 = vmatprep.subr.mxu0 0.0
          %1353 = vmatpush1.msra.mxu0 0.0
          %1354 = vmatprep.mubr.f32.mxu0 0.0
          %1355 = vmatmul.mubr.f32.gmra.mrb[0].mxu0 %v1288
          %v1356 = vpop.f32.mrb[0].mxu0
          %v1357 = vadd.f32 %v1286, %v1356
          %v1358 = vpop.f32.mrb[0].mxu0
          %1359 = vdwg.mxu0
          %1360 = vst [vmem:[#allocation3] sm:$0x3] %v1357
          %v1361 = vmax.f32 %v1357, 0.0
          %v1363 = vrot.slane %v1204, 1
          %v1365 = vmul.f32 %v1357, %v1363
          %v1366 = vsub.f32 %v1361, %v1365
          %v1367 = vand.u32 2147483647, %v1357
          %v1368 = vsub.f32 0.0, %v1367
          %v1369 = vmul.f32 %v1368, 1.442695
          %v1370 = vpow.pop %v1369
          %v1371 = vadd.f32 %v1370, 1.0
          %v1372 = vlog2.pop %v1371
          %v1373 = vmul.f32 %v1372, 0.6931472
          %v1374 = vadd.f32 %v1366, %v1373
          %vm1375 = vcmask 17408
          %v1376 = vsel %vm1375, %v1374, 0.0
          %1377 = vadd.xlane.f32.xlu0 %v1376
          %v1378 = vpop.xlane.xlu0 %1377
          %v1379 = vrot.slane %v1378, 4
          %v1380 = vadd.f32 %v1378, %v1379
          %v1381 = vrot.slane %v1380, 2
          %v1382 = vadd.f32 %v1380, %v1381
          %v1383 = vrot.slane %v1382, 1
          %v1384 = vadd.f32 %v1382, %v1383
          %s1385 = vtos %v1384
          %v1386 = vrcp.pop 6.0
          %s1387 = vtos %v1386
          %s1388 = smul.f32 %s1385, %s1387
          %v1389 = vstv %s1388
          %vm1390 = vcmask 0
          %1391 = vst.msk [vmem:[#allocation5] sm:$0x1] %vm1390, %v1389
        $region56: #{bert_multilabel_forward.1} parent=47 // pred_fallthru
          _
        // Predicated region
        $region57: #{bert_multilabel_forward.1} parent=47 // pred_check
          %p1392 = pneg %p192
        $region58: #{bert_multilabel_forward.1} parent=47 // pred_check_branch
          %1394 = sbr.rel (%p1392) target = $region60
        $region59: #{bert_multilabel_forward.1} parent=47 // pred_region
          %s1396 = ssub.s32 32, 32
          %1397 = vsyncadd [#allocation4], %s1396
          %s1399 = sshll.u32 [#allocation3], 4
          %s1400 = int_to_ptr.vmem [resolvable:$true] %s1399
          %1402 = dma.vmem_to_hbm [thread:$0]  %s1400, 32, %s7, [#allocation4]
        $region60: #{bert_multilabel_forward.1} parent=47 // pred_fallthru
          _
        // Predicated region
        $region61: #{bert_multilabel_forward.1} parent=47 // pred_check
          %p1403 = pneg %p213
        $region62: #{bert_multilabel_forward.1} parent=47 // pred_check_branch
          %1405 = sbr.rel (%p1403) target = $region64
        $region63: #{bert_multilabel_forward.1} parent=47 // pred_region
          %s1407 = ssub.s32 16, 16
          %1408 = vsyncadd [#allocation6], %s1407
          %s1410 = sshll.u32 [#allocation5], 4
          %s1411 = int_to_ptr.vmem [resolvable:$true] %s1410
          %1413 = dma.vmem_to_hbm [thread:$0]  %s1411, 16, %s8, [#allocation6]
        $region64: #{bert_multilabel_forward.1} parent=47 // pred_fallthru
          _
        // Predicated region
        $region65: #{bert_multilabel_forward.1} parent=47 // pred_check
          %p1414 = pneg %p192
        $region66: #{bert_multilabel_forward.1} parent=47 // pred_check_branch
          %1416 = sbr.rel (%p1414) target = $region68
        $region67: #{bert_multilabel_forward.1} parent=47 // pred_region
          %1417 = dma.done [#allocation4], 32
        $region68: #{bert_multilabel_forward.1} parent=47 // pred_fallthru
          _
        // Predicated region
        $region69: #{bert_multilabel_forward.1} parent=47 // pred_check
          %p1418 = pneg %p213
        $region70: #{bert_multilabel_forward.1} parent=47 // pred_check_branch
          %1420 = sbr.rel (%p1418) target = $region72
        $region71: #{bert_multilabel_forward.1} parent=47 // pred_region
          %1421 = dma.done [#allocation6], 16
        $region72: #{bert_multilabel_forward.1} parent=47 // pred_fallthru
          _
      $region48: #{bert_multilabel_forward.1} parent=5 // pred_fallthru
        _
      %p1422 = scmp.le.s32.totalorder 2, %s17
      // Predicated region
      $region73: #{bert_multilabel_forward.1} parent=5 // pred_check
        %p1423 = pneg %p1422
      $region74: #{bert_multilabel_forward.1} parent=5 // pred_check_branch
        %1425 = sbr.rel (%p1423) target = $region76
      $region75: #{bert_multilabel_forward.1} parent=5 // pred_region
        %s1426 = ssub.s32 %s17, 2
      $region76: #{bert_multilabel_forward.1} parent=5 // pred_fallthru
        _
    $region6: #{bert_multilabel_forward.1} parent=1 // loop_footer
      %s21 = sadd.s32 1, %s17
    $region7: #{bert_multilabel_forward.1} parent=1 // loop_footer_branch
      %16 = sbr.rel target = $region3
    $region8: #{bert_multilabel_forward.1} parent=1 // loop_exit
      _
    %1427 = vsyncpa [#allocation4], 1
    %s1428 = scalar_lea.sflag [#allocation4], 1
    %1429 = vsyncpa %s1428, 1
    %1430 = vsyncpa [#allocation6], 1

</llo_original>
